<compile_context>
chip_gen: v7x
topology: tpu7x:2x2x1
jax: 0.10.0
libtpu: 0.0.40
codegen_flags: <defaults>
</compile_context>

<pallas_src>
import functools

import jax
import jax.numpy as jnp
from jax import lax
from jax.experimental import pallas as pl
from jax.experimental.pallas import tpu as pltpu

_LANE = 128      # vreg lane width
_SUBLANE = 8     # vreg sublane count


def _round_up(n, m):
    return (n + m - 1) // m * m


def rnn_classifier_kernel(x_ref, h0_ref,
                          wih0_ref, whh0_ref, b0_ref,
                          wih1_ref, whh1_ref, b1_ref,
                          wfc_ref, bfc_ref,
                          y_ref, hn_ref,
                          xproj_ref):
    """All refs in VMEM (padded: Bp = B->8 sublanes, Hp = H->128 lanes, Cp = in_c->8).

    x_ref     : (T*Bp, Cp)     time-flattened, batch/channel-padded input
    h0_ref    : (2, Bp, Hp)    initial hidden state (padded)
    wih0_ref  : (Cp, Hp)       layer-0 W_ih^T (zero-padded)
    whh0_ref  : (Hp, Hp)       layer-0 W_hh^T (zero-padded)
    b0_ref    : (1, Hp)        layer-0 (b_ih + b_hh)
    wih1_ref  : (Hp, Hp)       layer-1 W_ih^T
    whh1_ref  : (Hp, Hp)       layer-1 W_hh^T
    b1_ref    : (1, Hp)        layer-1 (b_ih + b_hh)
    wfc_ref   : (Hp, Yp)       classifier weight^T (only column 0 is real)
    bfc_ref   : (1, Yp)        classifier bias     (only column 0 is real)
    y_ref     : (Bp, Yp)       sigmoid(logits) of final top-layer hidden state
    hn_ref    : (2, Bp, Hp)    final hidden state of each layer
    xproj_ref : (T*Bp, Hp)     scratch: precomputed layer-0 input projection
    """
    Bp = h0_ref.shape[1]
    T = x_ref.shape[0] // Bp

    # --- hoisted layer-0 input projection (no serial dependency) ------------
    xproj_ref[...] = (
        jnp.dot(x_ref[...], wih0_ref[...], preferred_element_type=jnp.float32)
        + b0_ref[...])

    # hoist the layer-1 bias broadcast out of the recurrence
    b1 = jnp.broadcast_to(b1_ref[...], (Bp, b1_ref.shape[1]))

    h0 = h0_ref[0]   # (Bp, Hp)
    h1 = h0_ref[1]   # (Bp, Hp)

    def step(t, carry):
        h0, h1 = carry
        off = pl.multiple_of(t * Bp, _SUBLANE)
        xp_t = xproj_ref[pl.ds(off, Bp), :]          # (Bp, Hp)

        # layer-1 recurrent term: depends only on h1_prev, so it is issued
        # first and overlaps with the layer-0 matmul->tanh critical chain.
        r1 = jnp.dot(h1, whh1_ref[...],
                     preferred_element_type=jnp.float32) + b1

        # layer 0: h0_t = tanh(x_t W_ih0^T + b0 + h0_{t-1} W_hh0^T)
        h0 = jnp.tanh(
            xp_t + jnp.dot(h0, whh0_ref[...],
                           preferred_element_type=jnp.float32))

        # layer 1: h1_t = tanh(h0_t W_ih1^T + r1)
        h1 = jnp.tanh(
            jnp.dot(h0, wih1_ref[...],
                    preferred_element_type=jnp.float32) + r1)
        return (h0, h1)

    # T is static -> fully unroll for LLO scheduling visibility.
    h0, h1 = lax.fori_loop(0, T, step, (h0, h1), unroll=True)

    hn_ref[0] = h0
    hn_ref[1] = h1

    # classifier on the final top-layer hidden state (== rnn output x[-1])
    logits = jnp.dot(h1, wfc_ref[...],
                     preferred_element_type=jnp.float32) + bfc_ref[...]
    y_ref[...] = jax.nn.sigmoid(logits)


def preprocess_params(params):
    """One-time weight preprocessing (NOT on the per-call path):
    transpose to row-major (K, N), fold the two RNN biases, and zero-pad to
    lane/sublane-dense shapes."""
    hid_c, in_c = params["w_ih0"].shape
    Hp = _round_up(hid_c, _LANE)
    Cp = _round_up(in_c, _SUBLANE)
    Yp = _LANE  # classifier output padded to a full lane width

    def pad_t(w, rows, cols):
        wt = jnp.asarray(w, jnp.float32).T
        return jnp.zeros((rows, cols), jnp.float32).at[
            :wt.shape[0], :wt.shape[1]].set(wt)

    wih0 = pad_t(params["w_ih0"], Cp, Hp)            # (Cp, Hp)
    whh0 = pad_t(params["w_hh0"], Hp, Hp)            # (Hp, Hp)
    b0 = jnp.zeros((1, Hp), jnp.float32).at[0, :hid_c].set(
        params["b_ih0"] + params["b_hh0"])

    wih1 = pad_t(params["w_ih1"], Hp, Hp)            # (Hp, Hp)
    whh1 = pad_t(params["w_hh1"], Hp, Hp)            # (Hp, Hp)
    b1 = jnp.zeros((1, Hp), jnp.float32).at[0, :hid_c].set(
        params["b_ih1"] + params["b_hh1"])

    wfc = pad_t(params["w_fc"], Hp, Yp)              # (Hp, Yp), col 0 real
    bfc = jnp.zeros((1, Yp), jnp.float32).at[0, :1].set(params["b_fc"])

    return {"wih0": wih0, "whh0": whh0, "b0": b0,
            "wih1": wih1, "whh1": whh1, "b1": b1,
            "wfc": wfc, "bfc": bfc}


@functools.partial(jax.jit, static_argnames=("hid_c",))
def rnn_classifier_forward(x, hn, prepped, *, hid_c):
    """x: (T, B, in_c) f32, hn: (2, B, hid_c) f32 or None -> zeros."""
    T, B, in_c = x.shape
    Hp = prepped["whh0"].shape[0]
    Cp = prepped["wih0"].shape[0]
    Yp = prepped["wfc"].shape[1]
    Bp = _round_up(B, _SUBLANE)

    if hn is None:
        hn = jnp.zeros((2, B, hid_c), jnp.float32)

    # pad batch to a sublane multiple, channels/hidden to aligned widths; flatten T
    x_p = jnp.zeros((T, Bp, Cp), jnp.float32).at[:, :B, :in_c].set(x)
    x_flat = x_p.reshape(T * Bp, Cp)
    h0_p = jnp.zeros((2, Bp, Hp), jnp.float32).at[:, :B, :hid_c].set(hn)

    vmem = pl.BlockSpec(memory_space=pltpu.MemorySpace.VMEM)

    y_p, hn_p = pl.pallas_call(
        rnn_classifier_kernel,
        out_shape=(jax.ShapeDtypeStruct((Bp, Yp), jnp.float32),
                   jax.ShapeDtypeStruct((2, Bp, Hp), jnp.float32)),
        in_specs=[vmem] * 10,
        out_specs=(vmem, vmem),
        scratch_shapes=[pltpu.VMEM((T * Bp, Hp), jnp.float32)],
    )(x_flat, h0_p,
      prepped["wih0"], prepped["whh0"], prepped["b0"],
      prepped["wih1"], prepped["whh1"], prepped["b1"],
      prepped["wfc"], prepped["bfc"])

    return y_p[:B, :1], hn_p[:, :B, :hid_c]


def rnn_classifier_reference(x, hn, params):
    """Pure-JAX reference mirroring torch nn.RNN (tanh) + Linear + Sigmoid."""
    T = x.shape[0]
    h0, h1 = hn[0], hn[1]
    for t in range(T):
        h0 = jnp.tanh(x[t] @ params["w_ih0"].T + params["b_ih0"]
                      + h0 @ params["w_hh0"].T + params["b_hh0"])
        h1 = jnp.tanh(h0 @ params["w_ih1"].T + params["b_ih1"]
                      + h1 @ params["w_hh1"].T + params["b_hh1"])
    y = jax.nn.sigmoid(h1 @ params["w_fc"].T + params["b_fc"])
    return y, jnp.stack([h0, h1])


def init_params(key, in_c, hid_c):
    ks = jax.random.split(key, 10)
    s = 1.0 / jnp.sqrt(hid_c)
    u = lambda k, shape: jax.random.uniform(k, shape, jnp.float32, -s, s)
    return {
        "w_ih0": u(ks[0], (hid_c, in_c)),
        "w_hh0": u(ks[1], (hid_c, hid_c)),
        "b_ih0": u(ks[2], (hid_c,)),
        "b_hh0": u(ks[3], (hid_c,)),
        "w_ih1": u(ks[4], (hid_c, hid_c)),
        "w_hh1": u(ks[5], (hid_c, hid_c)),
        "b_ih1": u(ks[6], (hid_c,)),
        "b_hh1": u(ks[7], (hid_c,)),
        "w_fc":  u(ks[8], (1, hid_c)),
        "b_fc":  u(ks[9], (1,)),
    }


if __name__ == "__main__":
    T, B, in_c, hid_c = 8, 2, 4, 32

    key = jax.random.PRNGKey(0)
    k_param, k_x, k_h = jax.random.split(key, 3)
    params = init_params(k_param, in_c, hid_c)
    x = jax.random.normal(k_x, (T, B, in_c), jnp.float32)
    hn = jax.random.normal(k_h, (2, B, hid_c), jnp.float32)

    prepped = preprocess_params(params)   # one-time, off the per-call path

    y, hn_out = rnn_classifier_forward(x, hn, prepped, hid_c=hid_c)
    y = jax.block_until_ready(y)
    hn_out = jax.block_until_ready(hn_out)

    y_ref, hn_ref = rnn_classifier_reference(x, hn, params)
    assert y.shape == (B, 1) and hn_out.shape == (2, B, hid_c)
    assert jnp.allclose(y, y_ref, atol=1e-4, rtol=1e-4)
    assert jnp.allclose(hn_out, hn_ref, atol=1e-4, rtol=1e-4)

    print("KERNEL_OK")
</pallas_src>

<mosaic_0001>
module attributes {stable_mosaic.version = 11 : i64} {
  func.func @rnn_classifier_kernel(%arg0: memref<64x8xf32, #tpu.memory_space<vmem>>, %arg1: memref<2x8x128xf32, #tpu.memory_space<vmem>>, %arg2: memref<8x128xf32, #tpu.memory_space<vmem>>, %arg3: memref<128x128xf32, #tpu.memory_space<vmem>>, %arg4: memref<1x128xf32, #tpu.memory_space<vmem>>, %arg5: memref<128x128xf32, #tpu.memory_space<vmem>>, %arg6: memref<128x128xf32, #tpu.memory_space<vmem>>, %arg7: memref<1x128xf32, #tpu.memory_space<vmem>>, %arg8: memref<128x128xf32, #tpu.memory_space<vmem>>, %arg9: memref<1x128xf32, #tpu.memory_space<vmem>>, %arg10: memref<8x128xf32, #tpu.memory_space<vmem>>, %arg11: memref<2x8x128xf32, #tpu.memory_space<vmem>>, %arg12: memref<64x128xf32, #tpu.memory_space<vmem>>) attributes {dimension_semantics = [], scalar_prefetch = 0 : i64, scratch_operands = 1 : i64, tpu.core_type = #tpu.core_type<tc>} {
    %c0 = arith.constant 0 : index
    %c0_0 = arith.constant 0 : index
    %0 = vector.load %arg0[%c0, %c0_0] : memref<64x8xf32, #tpu.memory_space<vmem>>, vector<64x8xf32>
    %c0_1 = arith.constant 0 : index
    %c0_2 = arith.constant 0 : index
    %1 = vector.load %arg2[%c0_1, %c0_2] : memref<8x128xf32, #tpu.memory_space<vmem>>, vector<8x128xf32>
    %cst = arith.constant dense<0.000000e+00> : vector<64x128xf32>
    %2 = tpu.matmul %0, %1, %cst {dimension_numbers = #tpu.dot_dimension_numbers<[1], [0], [0], [1], [0, 0, 1, 1], [], []>} : vector<64x8xf32>, vector<8x128xf32>, vector<64x128xf32> -> vector<64x128xf32>
    %c0_3 = arith.constant 0 : index
    %c0_4 = arith.constant 0 : index
    %3 = vector.load %arg4[%c0_3, %c0_4] : memref<1x128xf32, #tpu.memory_space<vmem>>, vector<1x128xf32>
    %4 = vector.broadcast %3 : vector<1x128xf32> to vector<64x128xf32>
    %5 = arith.addf %2, %4 : vector<64x128xf32>
    %c0_5 = arith.constant 0 : index
    %c0_6 = arith.constant 0 : index
    %6 = vector.load %arg12[%c0_5, %c0_6] : memref<64x128xf32, #tpu.memory_space<vmem>>, vector<64x128xf32>
    tpu.vector_store %arg12[%c0_5, %c0_6], %5 {strides = array<i32>} : memref<64x128xf32, #tpu.memory_space<vmem>>, vector<64x128xf32>,
    %c0_7 = arith.constant 0 : index
    %c0_8 = arith.constant 0 : index
    %7 = vector.load %arg7[%c0_7, %c0_8] : memref<1x128xf32, #tpu.memory_space<vmem>>, vector<1x128xf32>
    %8 = vector.shape_cast %7 : vector<1x128xf32> to vector<1x128xf32>
    %9 = vector.broadcast %8 : vector<1x128xf32> to vector<8x128xf32>
    %c0_9 = arith.constant 0 : index
    %c0_10 = arith.constant 0 : index
    %c0_11 = arith.constant 0 : index
    %10 = vector.load %arg1[%c0_9, %c0_10, %c0_11] : memref<2x8x128xf32, #tpu.memory_space<vmem>>, vector<1x8x128xf32>
    %11 = vector.shape_cast %10 : vector<1x8x128xf32> to vector<8x128xf32>
    %c1 = arith.constant 1 : index
    %c0_12 = arith.constant 0 : index
    %c0_13 = arith.constant 0 : index
    %12 = vector.load %arg1[%c1, %c0_12, %c0_13] : memref<2x8x128xf32, #tpu.memory_space<vmem>>, vector<1x8x128xf32>
    %13 = vector.shape_cast %12 : vector<1x8x128xf32> to vector<8x128xf32>
    %c0_i32 = arith.constant 0 : i32
    %c8_i32 = arith.constant 8 : i32
    %14 = arith.muli %c0_i32, %c8_i32 : i32
    %15 = tpu.assume_multiple %14, 8 : i32
    %16 = arith.index_cast %15 : i32 to index
    %c0_14 = arith.constant 0 : index
    %17 = vector.load %arg12[%16, %c0_14] : memref<64x128xf32, #tpu.memory_space<vmem>>, vector<8x128xf32>
    %c0_15 = arith.constant 0 : index
    %c0_16 = arith.constant 0 : index
    %18 = vector.load %arg6[%c0_15, %c0_16] : memref<128x128xf32, #tpu.memory_space<vmem>>, vector<128x128xf32>
    %cst_17 = arith.constant dense<0.000000e+00> : vector<8x128xf32>
    %19 = tpu.matmul %13, %18, %cst_17 {dimension_numbers = #tpu.dot_dimension_numbers<[1], [0], [0], [1], [0, 0, 1, 1], [], []>} : vector<8x128xf32>, vector<128x128xf32>, vector<8x128xf32> -> vector<8x128xf32>
    %20 = arith.addf %19, %9 : vector<8x128xf32>
    %c0_18 = arith.constant 0 : index
    %c0_19 = arith.constant 0 : index
    %21 = vector.load %arg3[%c0_18, %c0_19] : memref<128x128xf32, #tpu.memory_space<vmem>>, vector<128x128xf32>
    %cst_20 = arith.constant dense<0.000000e+00> : vector<8x128xf32>
    %22 = tpu.matmul %11, %21, %cst_20 {dimension_numbers = #tpu.dot_dimension_numbers<[1], [0], [0], [1], [0, 0, 1, 1], [], []>} : vector<8x128xf32>, vector<128x128xf32>, vector<8x128xf32> -> vector<8x128xf32>
    %23 = arith.addf %17, %22 : vector<8x128xf32>
    %24 = math.tanh %23 : vector<8x128xf32>
    %c0_21 = arith.constant 0 : index
    %c0_22 = arith.constant 0 : index
    %25 = vector.load %arg5[%c0_21, %c0_22] : memref<128x128xf32, #tpu.memory_space<vmem>>, vector<128x128xf32>
    %cst_23 = arith.constant dense<0.000000e+00> : vector<8x128xf32>
    %26 = tpu.matmul %24, %25, %cst_23 {dimension_numbers = #tpu.dot_dimension_numbers<[1], [0], [0], [1], [0, 0, 1, 1], [], []>} : vector<8x128xf32>, vector<128x128xf32>, vector<8x128xf32> -> vector<8x128xf32>
    %27 = arith.addf %26, %20 : vector<8x128xf32>
    %28 = math.tanh %27 : vector<8x128xf32>
    %c1_i32 = arith.constant 1 : i32
    %c8_i32_24 = arith.constant 8 : i32
    %29 = arith.muli %c1_i32, %c8_i32_24 : i32
    %30 = tpu.assume_multiple %29, 8 : i32
    %31 = arith.index_cast %30 : i32 to index
    %c0_25 = arith.constant 0 : index
    %32 = vector.load %arg12[%31, %c0_25] : memref<64x128xf32, #tpu.memory_space<vmem>>, vector<8x128xf32>
    %c0_26 = arith.constant 0 : index
    %c0_27 = arith.constant 0 : index
    %33 = vector.load %arg6[%c0_26, %c0_27] : memref<128x128xf32, #tpu.memory_space<vmem>>, vector<128x128xf32>
    %cst_28 = arith.constant dense<0.000000e+00> : vector<8x128xf32>
    %34 = tpu.matmul %28, %33, %cst_28 {dimension_numbers = #tpu.dot_dimension_numbers<[1], [0], [0], [1], [0, 0, 1, 1], [], []>} : vector<8x128xf32>, vector<128x128xf32>, vector<8x128xf32> -> vector<8x128xf32>
    %35 = arith.addf %34, %9 : vector<8x128xf32>
    %c0_29 = arith.constant 0 : index
    %c0_30 = arith.constant 0 : index
    %36 = vector.load %arg3[%c0_29, %c0_30] : memref<128x128xf32, #tpu.memory_space<vmem>>, vector<128x128xf32>
    %cst_31 = arith.constant dense<0.000000e+00> : vector<8x128xf32>
    %37 = tpu.matmul %24, %36, %cst_31 {dimension_numbers = #tpu.dot_dimension_numbers<[1], [0], [0], [1], [0, 0, 1, 1], [], []>} : vector<8x128xf32>, vector<128x128xf32>, vector<8x128xf32> -> vector<8x128xf32>
    %38 = arith.addf %32, %37 : vector<8x128xf32>
    %39 = math.tanh %38 : vector<8x128xf32>
    %c0_32 = arith.constant 0 : index
    %c0_33 = arith.constant 0 : index
    %40 = vector.load %arg5[%c0_32, %c0_33] : memref<128x128xf32, #tpu.memory_space<vmem>>, vector<128x128xf32>
    %cst_34 = arith.constant dense<0.000000e+00> : vector<8x128xf32>
    %41 = tpu.matmul %39, %40, %cst_34 {dimension_numbers = #tpu.dot_dimension_numbers<[1], [0], [0], [1], [0, 0, 1, 1], [], []>} : vector<8x128xf32>, vector<128x128xf32>, vector<8x128xf32> -> vector<8x128xf32>
    %42 = arith.addf %41, %35 : vector<8x128xf32>
    %43 = math.tanh %42 : vector<8x128xf32>
    %c2_i32 = arith.constant 2 : i32
    %c8_i32_35 = arith.constant 8 : i32
    %44 = arith.muli %c2_i32, %c8_i32_35 : i32
    %45 = tpu.assume_multiple %44, 8 : i32
    %46 = arith.index_cast %45 : i32 to index
    %c0_36 = arith.constant 0 : index
    %47 = vector.load %arg12[%46, %c0_36] : memref<64x128xf32, #tpu.memory_space<vmem>>, vector<8x128xf32>
    %c0_37 = arith.constant 0 : index
    %c0_38 = arith.constant 0 : index
    %48 = vector.load %arg6[%c0_37, %c0_38] : memref<128x128xf32, #tpu.memory_space<vmem>>, vector<128x128xf32>
    %cst_39 = arith.constant dense<0.000000e+00> : vector<8x128xf32>
    %49 = tpu.matmul %43, %48, %cst_39 {dimension_numbers = #tpu.dot_dimension_numbers<[1], [0], [0], [1], [0, 0, 1, 1], [], []>} : vector<8x128xf32>, vector<128x128xf32>, vector<8x128xf32> -> vector<8x128xf32>
    %50 = arith.addf %49, %9 : vector<8x128xf32>
    %c0_40 = arith.constant 0 : index
    %c0_41 = arith.constant 0 : index
    %51 = vector.load %arg3[%c0_40, %c0_41] : memref<128x128xf32, #tpu.memory_space<vmem>>, vector<128x128xf32>
    %cst_42 = arith.constant dense<0.000000e+00> : vector<8x128xf32>
    %52 = tpu.matmul %39, %51, %cst_42 {dimension_numbers = #tpu.dot_dimension_numbers<[1], [0], [0], [1], [0, 0, 1, 1], [], []>} : vector<8x128xf32>, vector<128x128xf32>, vector<8x128xf32> -> vector<8x128xf32>
    %53 = arith.addf %47, %52 : vector<8x128xf32>
    %54 = math.tanh %53 : vector<8x128xf32>
    %c0_43 = arith.constant 0 : index
    %c0_44 = arith.constant 0 : index
    %55 = vector.load %arg5[%c0_43, %c0_44] : memref<128x128xf32, #tpu.memory_space<vmem>>, vector<128x128xf32>
    %cst_45 = arith.constant dense<0.000000e+00> : vector<8x128xf32>
    %56 = tpu.matmul %54, %55, %cst_45 {dimension_numbers = #tpu.dot_dimension_numbers<[1], [0], [0], [1], [0, 0, 1, 1], [], []>} : vector<8x128xf32>, vector<128x128xf32>, vector<8x128xf32> -> vector<8x128xf32>
    %57 = arith.addf %56, %50 : vector<8x128xf32>
    %58 = math.tanh %57 : vector<8x128xf32>
    %c3_i32 = arith.constant 3 : i32
    %c8_i32_46 = arith.constant 8 : i32
    %59 = arith.muli %c3_i32, %c8_i32_46 : i32
    %60 = tpu.assume_multiple %59, 8 : i32
    %61 = arith.index_cast %60 : i32 to index
    %c0_47 = arith.constant 0 : index
    %62 = vector.load %arg12[%61, %c0_47] : memref<64x128xf32, #tpu.memory_space<vmem>>, vector<8x128xf32>
    %c0_48 = arith.constant 0 : index
    %c0_49 = arith.constant 0 : index
    %63 = vector.load %arg6[%c0_48, %c0_49] : memref<128x128xf32, #tpu.memory_space<vmem>>, vector<128x128xf32>
    %cst_50 = arith.constant dense<0.000000e+00> : vector<8x128xf32>
    %64 = tpu.matmul %58, %63, %cst_50 {dimension_numbers = #tpu.dot_dimension_numbers<[1], [0], [0], [1], [0, 0, 1, 1], [], []>} : vector<8x128xf32>, vector<128x128xf32>, vector<8x128xf32> -> vector<8x128xf32>
    %65 = arith.addf %64, %9 : vector<8x128xf32>
    %c0_51 = arith.constant 0 : index
    %c0_52 = arith.constant 0 : index
    %66 = vector.load %arg3[%c0_51, %c0_52] : memref<128x128xf32, #tpu.memory_space<vmem>>, vector<128x128xf32>
    %cst_53 = arith.constant dense<0.000000e+00> : vector<8x128xf32>
    %67 = tpu.matmul %54, %66, %cst_53 {dimension_numbers = #tpu.dot_dimension_numbers<[1], [0], [0], [1], [0, 0, 1, 1], [], []>} : vector<8x128xf32>, vector<128x128xf32>, vector<8x128xf32> -> vector<8x128xf32>
    %68 = arith.addf %62, %67 : vector<8x128xf32>
    %69 = math.tanh %68 : vector<8x128xf32>
    %c0_54 = arith.constant 0 : index
    %c0_55 = arith.constant 0 : index
    %70 = vector.load %arg5[%c0_54, %c0_55] : memref<128x128xf32, #tpu.memory_space<vmem>>, vector<128x128xf32>
    %cst_56 = arith.constant dense<0.000000e+00> : vector<8x128xf32>
    %71 = tpu.matmul %69, %70, %cst_56 {dimension_numbers = #tpu.dot_dimension_numbers<[1], [0], [0], [1], [0, 0, 1, 1], [], []>} : vector<8x128xf32>, vector<128x128xf32>, vector<8x128xf32> -> vector<8x128xf32>
    %72 = arith.addf %71, %65 : vector<8x128xf32>
    %73 = math.tanh %72 : vector<8x128xf32>
    %c4_i32 = arith.constant 4 : i32
    %c8_i32_57 = arith.constant 8 : i32
    %74 = arith.muli %c4_i32, %c8_i32_57 : i32
    %75 = tpu.assume_multiple %74, 8 : i32
    %76 = arith.index_cast %75 : i32 to index
    %c0_58 = arith.constant 0 : index
    %77 = vector.load %arg12[%76, %c0_58] : memref<64x128xf32, #tpu.memory_space<vmem>>, vector<8x128xf32>
    %c0_59 = arith.constant 0 : index
    %c0_60 = arith.constant 0 : index
    %78 = vector.load %arg6[%c0_59, %c0_60] : memref<128x128xf32, #tpu.memory_space<vmem>>, vector<128x128xf32>
    %cst_61 = arith.constant dense<0.000000e+00> : vector<8x128xf32>
    %79 = tpu.matmul %73, %78, %cst_61 {dimension_numbers = #tpu.dot_dimension_numbers<[1], [0], [0], [1], [0, 0, 1, 1], [], []>} : vector<8x128xf32>, vector<128x128xf32>, vector<8x128xf32> -> vector<8x128xf32>
    %80 = arith.addf %79, %9 : vector<8x128xf32>
    %c0_62 = arith.constant 0 : index
    %c0_63 = arith.constant 0 : index
    %81 = vector.load %arg3[%c0_62, %c0_63] : memref<128x128xf32, #tpu.memory_space<vmem>>, vector<128x128xf32>
    %cst_64 = arith.constant dense<0.000000e+00> : vector<8x128xf32>
    %82 = tpu.matmul %69, %81, %cst_64 {dimension_numbers = #tpu.dot_dimension_numbers<[1], [0], [0], [1], [0, 0, 1, 1], [], []>} : vector<8x128xf32>, vector<128x128xf32>, vector<8x128xf32> -> vector<8x128xf32>
    %83 = arith.addf %77, %82 : vector<8x128xf32>
    %84 = math.tanh %83 : vector<8x128xf32>
    %c0_65 = arith.constant 0 : index
    %c0_66 = arith.constant 0 : index
    %85 = vector.load %arg5[%c0_65, %c0_66] : memref<128x128xf32, #tpu.memory_space<vmem>>, vector<128x128xf32>
    %cst_67 = arith.constant dense<0.000000e+00> : vector<8x128xf32>
    %86 = tpu.matmul %84, %85, %cst_67 {dimension_numbers = #tpu.dot_dimension_numbers<[1], [0], [0], [1], [0, 0, 1, 1], [], []>} : vector<8x128xf32>, vector<128x128xf32>, vector<8x128xf32> -> vector<8x128xf32>
    %87 = arith.addf %86, %80 : vector<8x128xf32>
    %88 = math.tanh %87 : vector<8x128xf32>
    %c5_i32 = arith.constant 5 : i32
    %c8_i32_68 = arith.constant 8 : i32
    %89 = arith.muli %c5_i32, %c8_i32_68 : i32
    %90 = tpu.assume_multiple %89, 8 : i32
    %91 = arith.index_cast %90 : i32 to index
    %c0_69 = arith.constant 0 : index
    %92 = vector.load %arg12[%91, %c0_69] : memref<64x128xf32, #tpu.memory_space<vmem>>, vector<8x128xf32>
    %c0_70 = arith.constant 0 : index
    %c0_71 = arith.constant 0 : index
    %93 = vector.load %arg6[%c0_70, %c0_71] : memref<128x128xf32, #tpu.memory_space<vmem>>, vector<128x128xf32>
    %cst_72 = arith.constant dense<0.000000e+00> : vector<8x128xf32>
    %94 = tpu.matmul %88, %93, %cst_72 {dimension_numbers = #tpu.dot_dimension_numbers<[1], [0], [0], [1], [0, 0, 1, 1], [], []>} : vector<8x128xf32>, vector<128x128xf32>, vector<8x128xf32> -> vector<8x128xf32>
    %95 = arith.addf %94, %9 : vector<8x128xf32>
    %c0_73 = arith.constant 0 : index
    %c0_74 = arith.constant 0 : index
    %96 = vector.load %arg3[%c0_73, %c0_74] : memref<128x128xf32, #tpu.memory_space<vmem>>, vector<128x128xf32>
    %cst_75 = arith.constant dense<0.000000e+00> : vector<8x128xf32>
    %97 = tpu.matmul %84, %96, %cst_75 {dimension_numbers = #tpu.dot_dimension_numbers<[1], [0], [0], [1], [0, 0, 1, 1], [], []>} : vector<8x128xf32>, vector<128x128xf32>, vector<8x128xf32> -> vector<8x128xf32>
    %98 = arith.addf %92, %97 : vector<8x128xf32>
    %99 = math.tanh %98 : vector<8x128xf32>
    %c0_76 = arith.constant 0 : index
    %c0_77 = arith.constant 0 : index
    %100 = vector.load %arg5[%c0_76, %c0_77] : memref<128x128xf32, #tpu.memory_space<vmem>>, vector<128x128xf32>
    %cst_78 = arith.constant dense<0.000000e+00> : vector<8x128xf32>
    %101 = tpu.matmul %99, %100, %cst_78 {dimension_numbers = #tpu.dot_dimension_numbers<[1], [0], [0], [1], [0, 0, 1, 1], [], []>} : vector<8x128xf32>, vector<128x128xf32>, vector<8x128xf32> -> vector<8x128xf32>
    %102 = arith.addf %101, %95 : vector<8x128xf32>
    %103 = math.tanh %102 : vector<8x128xf32>
    %c6_i32 = arith.constant 6 : i32
    %c8_i32_79 = arith.constant 8 : i32
    %104 = arith.muli %c6_i32, %c8_i32_79 : i32
    %105 = tpu.assume_multiple %104, 8 : i32
    %106 = arith.index_cast %105 : i32 to index
    %c0_80 = arith.constant 0 : index
    %107 = vector.load %arg12[%106, %c0_80] : memref<64x128xf32, #tpu.memory_space<vmem>>, vector<8x128xf32>
    %c0_81 = arith.constant 0 : index
    %c0_82 = arith.constant 0 : index
    %108 = vector.load %arg6[%c0_81, %c0_82] : memref<128x128xf32, #tpu.memory_space<vmem>>, vector<128x128xf32>
    %cst_83 = arith.constant dense<0.000000e+00> : vector<8x128xf32>
    %109 = tpu.matmul %103, %108, %cst_83 {dimension_numbers = #tpu.dot_dimension_numbers<[1], [0], [0], [1], [0, 0, 1, 1], [], []>} : vector<8x128xf32>, vector<128x128xf32>, vector<8x128xf32> -> vector<8x128xf32>
    %110 = arith.addf %109, %9 : vector<8x128xf32>
    %c0_84 = arith.constant 0 : index
    %c0_85 = arith.constant 0 : index
    %111 = vector.load %arg3[%c0_84, %c0_85] : memref<128x128xf32, #tpu.memory_space<vmem>>, vector<128x128xf32>
    %cst_86 = arith.constant dense<0.000000e+00> : vector<8x128xf32>
    %112 = tpu.matmul %99, %111, %cst_86 {dimension_numbers = #tpu.dot_dimension_numbers<[1], [0], [0], [1], [0, 0, 1, 1], [], []>} : vector<8x128xf32>, vector<128x128xf32>, vector<8x128xf32> -> vector<8x128xf32>
    %113 = arith.addf %107, %112 : vector<8x128xf32>
    %114 = math.tanh %113 : vector<8x128xf32>
    %c0_87 = arith.constant 0 : index
    %c0_88 = arith.constant 0 : index
    %115 = vector.load %arg5[%c0_87, %c0_88] : memref<128x128xf32, #tpu.memory_space<vmem>>, vector<128x128xf32>
    %cst_89 = arith.constant dense<0.000000e+00> : vector<8x128xf32>
    %116 = tpu.matmul %114, %115, %cst_89 {dimension_numbers = #tpu.dot_dimension_numbers<[1], [0], [0], [1], [0, 0, 1, 1], [], []>} : vector<8x128xf32>, vector<128x128xf32>, vector<8x128xf32> -> vector<8x128xf32>
    %117 = arith.addf %116, %110 : vector<8x128xf32>
    %118 = math.tanh %117 : vector<8x128xf32>
    %c7_i32 = arith.constant 7 : i32
    %c8_i32_90 = arith.constant 8 : i32
    %119 = arith.muli %c7_i32, %c8_i32_90 : i32
    %120 = tpu.assume_multiple %119, 8 : i32
    %121 = arith.index_cast %120 : i32 to index
    %c0_91 = arith.constant 0 : index
    %122 = vector.load %arg12[%121, %c0_91] : memref<64x128xf32, #tpu.memory_space<vmem>>, vector<8x128xf32>
    %c0_92 = arith.constant 0 : index
    %c0_93 = arith.constant 0 : index
    %123 = vector.load %arg6[%c0_92, %c0_93] : memref<128x128xf32, #tpu.memory_space<vmem>>, vector<128x128xf32>
    %cst_94 = arith.constant dense<0.000000e+00> : vector<8x128xf32>
    %124 = tpu.matmul %118, %123, %cst_94 {dimension_numbers = #tpu.dot_dimension_numbers<[1], [0], [0], [1], [0, 0, 1, 1], [], []>} : vector<8x128xf32>, vector<128x128xf32>, vector<8x128xf32> -> vector<8x128xf32>
    %125 = arith.addf %124, %9 : vector<8x128xf32>
    %c0_95 = arith.constant 0 : index
    %c0_96 = arith.constant 0 : index
    %126 = vector.load %arg3[%c0_95, %c0_96] : memref<128x128xf32, #tpu.memory_space<vmem>>, vector<128x128xf32>
    %cst_97 = arith.constant dense<0.000000e+00> : vector<8x128xf32>
    %127 = tpu.matmul %114, %126, %cst_97 {dimension_numbers = #tpu.dot_dimension_numbers<[1], [0], [0], [1], [0, 0, 1, 1], [], []>} : vector<8x128xf32>, vector<128x128xf32>, vector<8x128xf32> -> vector<8x128xf32>
    %128 = arith.addf %122, %127 : vector<8x128xf32>
    %129 = math.tanh %128 : vector<8x128xf32>
    %c0_98 = arith.constant 0 : index
    %c0_99 = arith.constant 0 : index
    %130 = vector.load %arg5[%c0_98, %c0_99] : memref<128x128xf32, #tpu.memory_space<vmem>>, vector<128x128xf32>
    %cst_100 = arith.constant dense<0.000000e+00> : vector<8x128xf32>
    %131 = tpu.matmul %129, %130, %cst_100 {dimension_numbers = #tpu.dot_dimension_numbers<[1], [0], [0], [1], [0, 0, 1, 1], [], []>} : vector<8x128xf32>, vector<128x128xf32>, vector<8x128xf32> -> vector<8x128xf32>
    %132 = arith.addf %131, %125 : vector<8x128xf32>
    %133 = math.tanh %132 : vector<8x128xf32>
    %c8_i32_101 = arith.constant 8 : i32
    %c0_102 = arith.constant 0 : index
    %c0_103 = arith.constant 0 : index
    %c0_104 = arith.constant 0 : index
    %134 = vector.load %arg11[%c0_102, %c0_103, %c0_104] : memref<2x8x128xf32, #tpu.memory_space<vmem>>, vector<1x8x128xf32>
    %135 = vector.shape_cast %134 : vector<1x8x128xf32> to vector<8x128xf32>
    %136 = vector.shape_cast %129 : vector<8x128xf32> to vector<1x8x128xf32>
    tpu.vector_store %arg11[%c0_102, %c0_103, %c0_104], %136 {strides = array<i32>} : memref<2x8x128xf32, #tpu.memory_space<vmem>>, vector<1x8x128xf32>,
    %c1_105 = arith.constant 1 : index
    %c0_106 = arith.constant 0 : index
    %c0_107 = arith.constant 0 : index
    %137 = vector.load %arg11[%c1_105, %c0_106, %c0_107] : memref<2x8x128xf32, #tpu.memory_space<vmem>>, vector<1x8x128xf32>
    %138 = vector.shape_cast %137 : vector<1x8x128xf32> to vector<8x128xf32>
    %139 = vector.shape_cast %133 : vector<8x128xf32> to vector<1x8x128xf32>
    tpu.vector_store %arg11[%c1_105, %c0_106, %c0_107], %139 {strides = array<i32>} : memref<2x8x128xf32, #tpu.memory_space<vmem>>, vector<1x8x128xf32>,
    %c0_108 = arith.constant 0 : index
    %c0_109 = arith.constant 0 : index
    %140 = vector.load %arg8[%c0_108, %c0_109] : memref<128x128xf32, #tpu.memory_space<vmem>>, vector<128x128xf32>
    %cst_110 = arith.constant dense<0.000000e+00> : vector<8x128xf32>
    %141 = tpu.matmul %133, %140, %cst_110 {dimension_numbers = #tpu.dot_dimension_numbers<[1], [0], [0], [1], [0, 0, 1, 1], [], []>} : vector<8x128xf32>, vector<128x128xf32>, vector<8x128xf32> -> vector<8x128xf32>
    %c0_111 = arith.constant 0 : index
    %c0_112 = arith.constant 0 : index
    %142 = vector.load %arg9[%c0_111, %c0_112] : memref<1x128xf32, #tpu.memory_space<vmem>>, vector<1x128xf32>
    %143 = vector.broadcast %142 : vector<1x128xf32> to vector<8x128xf32>
    %144 = arith.addf %141, %143 : vector<8x128xf32>
    %145 = arith.negf %144 : vector<8x128xf32>
    %146 = math.exp %145 : vector<8x128xf32>
    %cst_113 = arith.constant 1.000000e+00 : f32
    %147 = vector.broadcast %cst_113 : f32 to vector<8x128xf32>
    %148 = arith.addf %147, %146 : vector<8x128xf32>
    %149 = arith.divf %147, %148 : vector<8x128xf32>
    %c0_114 = arith.constant 0 : index
    %c0_115 = arith.constant 0 : index
    %150 = vector.load %arg10[%c0_114, %c0_115] : memref<8x128xf32, #tpu.memory_space<vmem>>, vector<8x128xf32>
    tpu.vector_store %arg10[%c0_114, %c0_115], %149 {strides = array<i32>} : memref<8x128xf32, #tpu.memory_space<vmem>>, vector<8x128xf32>,
    return
  }
}

</mosaic_0001>

<llo_original>
// kernel: rnn_classifier_forward.1
$region0: #{rnn_classifier_forward.1}
  #allocation0 [shape = 'u32[]', space=smem, size = 0x4, offset = 0x4, fixed_abs, tag = 'smem constant byte address 0x4 - core index']
  #allocation1 [shape = 'u32[144,128]{1,0:T(1,128)}', space=vmem, size = 0x12000, scoped, tag = 'internal scratch']
  #allocation2 [shape = 'f32[64,128]{1,0:T(8,128)}', space=vmem, size = 0x8000, scoped, tag = 'scratch operand']
  %s0 = inlined_call_operand.vmem [shape: f32[64,8], index: 0, kind: input, shape index: {}]
  %s1 = inlined_call_operand.vmem [shape: f32[2,8,128], index: 1, kind: input, shape index: {}]
  %s2 = inlined_call_operand.vmem [shape: f32[8,128], index: 2, kind: input, shape index: {}]
  %s3 = inlined_call_operand.vmem [shape: f32[128,128], index: 3, kind: input, shape index: {}]
  %s4 = inlined_call_operand.vmem [shape: f32[1,128], index: 4, kind: input, shape index: {}]
  %s5 = inlined_call_operand.hbm [shape: f32[128,128], index: 5, kind: input, shape index: {}]
  %s6 = inlined_call_operand.hbm [shape: f32[128,128], index: 6, kind: input, shape index: {}]
  %s7 = inlined_call_operand.vmem [shape: f32[1,128], index: 7, kind: input, shape index: {}]
  %s8 = inlined_call_operand.hbm [shape: f32[128,128], index: 8, kind: input, shape index: {}]
  %s9 = inlined_call_operand.vmem [shape: f32[1,128], index: 9, kind: input, shape index: {}]
  %s10 = inlined_call_operand.vmem [shape: f32[8,128], index: 10, kind: output, shape index: {0}]
  %s11 = inlined_call_operand.vmem [shape: f32[2,8,128], index: 11, kind: output, shape index: {1}]
  %12 = xla_tuple %s10, %s11
  %s13 = sld [smem:[#allocation0]]
  $region70: #{rnn_classifier_forward.1} parent=0
    _
  %s15 = ssub.s32 1, %s13
  %s16 = scalar_select 0, %s15, %s13
  $region1: #{rnn_classifier_forward.1} parent=0
    #allocation3 [shape = 'u8[65536]{0}', space=vmem, size = 0x10000, scoped, tag = 'input window, operand 5, single buffered']
    #allocation4 [shape = 's32[1]{0}', space=sflag, size = 0x4, scoped, tag = 'scoped memory for rnn_classifier_forward.1']
    #allocation5 [shape = 'u8[65536]{0}', space=vmem, size = 0x10000, scoped, tag = 'input window, operand 6, single buffered']
    #allocation6 [shape = 's32[1]{0}', space=sflag, size = 0x4, scoped, tag = 'scoped memory for rnn_classifier_forward.1']
    #allocation7 [shape = 'u8[65536]{0}', space=vmem, size = 0x10000, scoped, tag = 'input window, operand 8, single buffered']
    %17 = vsyncpa [#allocation4], 0
    %18 = vsyncpa [#allocation6], 0
    // Predicated region
    $region2: #{rnn_classifier_forward.1} parent=1 // pred_check
      _
    $region3: #{rnn_classifier_forward.1} parent=1 // pred_check_branch
      %20 = sbr.rel (0) target = $region5
    $region4: #{rnn_classifier_forward.1} parent=1 // pred_region
      _
    $region5: #{rnn_classifier_forward.1} parent=1 // pred_fallthru
      _
    // Predicated region
    $region6: #{rnn_classifier_forward.1} parent=1 // pred_check
      _
    $region7: #{rnn_classifier_forward.1} parent=1 // pred_check_branch
      %22 = sbr.rel (0) target = $region9
    $region8: #{rnn_classifier_forward.1} parent=1 // pred_region
      _
    $region9: #{rnn_classifier_forward.1} parent=1 // pred_fallthru
      _
    // Predicated region
    $region10: #{rnn_classifier_forward.1} parent=1 // pred_check
      _
    $region11: #{rnn_classifier_forward.1} parent=1 // pred_check_branch
      %24 = sbr.rel (0) target = $region13
    $region12: #{rnn_classifier_forward.1} parent=1 // pred_region
      _
    $region13: #{rnn_classifier_forward.1} parent=1 // pred_fallthru
      _
    // Predicated region
    $region14: #{rnn_classifier_forward.1} parent=1 // pred_check
      _
    $region15: #{rnn_classifier_forward.1} parent=1 // pred_check_branch
      %26 = sbr.rel (0) target = $region17
    $region16: #{rnn_classifier_forward.1} parent=1 // pred_region
      _
    $region17: #{rnn_classifier_forward.1} parent=1 // pred_fallthru
      _
    // Predicated region
    $region18: #{rnn_classifier_forward.1} parent=1 // pred_check
      _
    $region19: #{rnn_classifier_forward.1} parent=1 // pred_check_branch
      %28 = sbr.rel (0) target = $region21
    $region20: #{rnn_classifier_forward.1} parent=1 // pred_region
      _
    $region21: #{rnn_classifier_forward.1} parent=1 // pred_fallthru
      _
    // Predicated region
    $region22: #{rnn_classifier_forward.1} parent=1 // pred_check
      _
    $region23: #{rnn_classifier_forward.1} parent=1 // pred_check_branch
      %30 = sbr.rel (0) target = $region25
    $region24: #{rnn_classifier_forward.1} parent=1 // pred_region
      %s32 = ssub.s32 2048, 2048
      %33 = vsyncadd [#allocation4], %s32
      %s34 = sshll.u32 [#allocation3], 4
      %s35 = int_to_ptr.vmem [resolvable:$true] %s34
      %40 = dma.hbm_to_vmem [thread:$0]  %s5, 2048, %s35, [#allocation4], 128, 128, 8
    $region25: #{rnn_classifier_forward.1} parent=1 // pred_fallthru
      _
    // Predicated region
    $region26: #{rnn_classifier_forward.1} parent=1 // pred_check
      _
    $region27: #{rnn_classifier_forward.1} parent=1 // pred_check_branch
      %42 = sbr.rel (0) target = $region29
    $region28: #{rnn_classifier_forward.1} parent=1 // pred_region
      %s44 = ssub.s32 2048, 2048
      %45 = vsyncadd [#allocation6], %s44
      %s46 = sshll.u32 [#allocation5], 4
      %s47 = int_to_ptr.vmem [resolvable:$true] %s46
      %52 = dma.hbm_to_vmem [thread:$0]  %s6, 2048, %s47, [#allocation6], 128, 128, 8
    $region29: #{rnn_classifier_forward.1} parent=1 // pred_fallthru
      _
    // Predicated region
    $region30: #{rnn_classifier_forward.1} parent=1 // pred_check
      _
    $region31: #{rnn_classifier_forward.1} parent=1 // pred_check_branch
      %54 = sbr.rel (0) target = $region33
    $region32: #{rnn_classifier_forward.1} parent=1 // pred_region
      _
    $region33: #{rnn_classifier_forward.1} parent=1 // pred_fallthru
      _
    // Predicated region
    $region34: #{rnn_classifier_forward.1} parent=1 // pred_check
      _
    $region35: #{rnn_classifier_forward.1} parent=1 // pred_check_branch
      %56 = sbr.rel (0) target = $region37
    $region36: #{rnn_classifier_forward.1} parent=1 // pred_region
      %s58 = ssub.s32 2048, 2048
      %59 = vsyncadd [#allocation6], %s58
      %s60 = sshll.u32 [#allocation7], 4
      %s61 = int_to_ptr.vmem [resolvable:$true] %s60
      %66 = dma.hbm_to_vmem [thread:$0]  %s8, 2048, %s61, [#allocation6], 128, 128, 8
    $region37: #{rnn_classifier_forward.1} parent=1 // pred_fallthru
      _
    // Predicated region
    $region38: #{rnn_classifier_forward.1} parent=1 // pred_check
      _
    $region39: #{rnn_classifier_forward.1} parent=1 // pred_check_branch
      %68 = sbr.rel (0) target = $region41
    $region40: #{rnn_classifier_forward.1} parent=1 // pred_region
      _
    $region41: #{rnn_classifier_forward.1} parent=1 // pred_fallthru
      _
    // Predicated region
    $region42: #{rnn_classifier_forward.1} parent=1 // pred_check
      _
    $region43: #{rnn_classifier_forward.1} parent=1 // pred_check_branch
      %70 = sbr.rel (0) target = $region45
    $region44: #{rnn_classifier_forward.1} parent=1 // pred_region
      %71 = dma.done [#allocation4], 2048
    $region45: #{rnn_classifier_forward.1} parent=1 // pred_fallthru
      _
    // Predicated region
    $region46: #{rnn_classifier_forward.1} parent=1 // pred_check
      _
    $region47: #{rnn_classifier_forward.1} parent=1 // pred_check_branch
      %73 = sbr.rel (0) target = $region49
    $region48: #{rnn_classifier_forward.1} parent=1 // pred_region
      %74 = dma.done [#allocation6], 2048
    $region49: #{rnn_classifier_forward.1} parent=1 // pred_fallthru
      _
    // Predicated region
    $region50: #{rnn_classifier_forward.1} parent=1 // pred_check
      _
    $region51: #{rnn_classifier_forward.1} parent=1 // pred_check_branch
      %76 = sbr.rel (0) target = $region53
    $region52: #{rnn_classifier_forward.1} parent=1 // pred_region
      %77 = dma.done [#allocation6], 2048
    $region53: #{rnn_classifier_forward.1} parent=1 // pred_fallthru
      _
    %v78 = vld [vmem:[%s0] sm:$0xff]
    %v79 = vld [vmem:[%s0 + $0x8] sm:$0xff]
    %v80 = vld [vmem:[%s0 + $0x10] sm:$0xff]
    %v81 = vld [vmem:[%s0 + $0x18] sm:$0xff]
    %v82 = vld [vmem:[%s0 + $0x20] sm:$0xff]
    %v83 = vld [vmem:[%s0 + $0x28] sm:$0xff]
    %v84 = vld [vmem:[%s0 + $0x30] sm:$0xff]
    %v85 = vld [vmem:[%s0 + $0x38] sm:$0xff]
    %v86 = vld [vmem:[%s2] sm:$0xff]
    %v87 = vld [vmem:[%s4] sm:$0x1]
    %v89 = vlaneseq
    %v90 = vshrl.u32 %v89, 7
    %v91 = vsub.s32 0, %v90
    %v92 = vrot.slane %v87, %v91
    %vm94 = vcmask 64512
    %v96 = vsel %vm94, %v78, 0
    %v99 = vsel %vm94, %v79, 0
    %v102 = vsel %vm94, %v80, 0
    %v105 = vsel %vm94, %v81, 0
    %v108 = vsel %vm94, %v82, 0
    %v111 = vsel %vm94, %v83, 0
    %v114 = vsel %vm94, %v84, 0
    %v117 = vsel %vm94, %v85, 0
    %119 = vmatprep.subr.mxu0 0.0
    %120 = vmatpush1.msra.mxu0 %v86
    %121 = vmatprep.subr.mxu0 0.0
    %122 = vmatpush1.msra.mxu0 0.0
    %123 = vmatprep.subr.mxu0 0.0
    %124 = vmatpush1.msra.mxu0 0.0
    %125 = vmatprep.subr.mxu0 0.0
    %126 = vmatpush1.msra.mxu0 0.0
    %127 = vmatprep.subr.mxu0 0.0
    %128 = vmatpush1.msra.mxu0 0.0
    %129 = vmatprep.subr.mxu0 0.0
    %130 = vmatpush1.msra.mxu0 0.0
    %131 = vmatprep.subr.mxu0 0.0
    %132 = vmatpush1.msra.mxu0 0.0
    %133 = vmatprep.subr.mxu0 0.0
    %134 = vmatpush1.msra.mxu0 0.0
    %135 = vmatprep.subr.mxu0 0.0
    %136 = vmatpush1.msra.mxu0 0.0
    %137 = vmatprep.subr.mxu0 0.0
    %138 = vmatpush1.msra.mxu0 0.0
    %139 = vmatprep.subr.mxu0 0.0
    %140 = vmatpush1.msra.mxu0 0.0
    %141 = vmatprep.subr.mxu0 0.0
    %142 = vmatpush1.msra.mxu0 0.0
    %143 = vmatprep.subr.mxu0 0.0
    %144 = vmatpush1.msra.mxu0 0.0
    %145 = vmatprep.subr.mxu0 0.0
    %146 = vmatpush1.msra.mxu0 0.0
    %147 = vmatprep.subr.mxu0 0.0
    %148 = vmatpush1.msra.mxu0 0.0
    %149 = vmatprep.subr.mxu0 0.0
    %150 = vmatpush1.msra.mxu0 0.0
    %151 = vmatprep.subr.mxu0 0.0
    %152 = vmatpush1.msra.mxu0 0.0
    %153 = vmatprep.subr.mxu0 0.0
    %154 = vmatpush1.msra.mxu0 0.0
    %155 = vmatprep.subr.mxu0 0.0
    %156 = vmatpush1.msra.mxu0 0.0
    %157 = vmatprep.subr.mxu0 0.0
    %158 = vmatpush1.msra.mxu0 0.0
    %159 = vmatprep.subr.mxu0 0.0
    %160 = vmatpush1.msra.mxu0 0.0
    %161 = vmatprep.subr.mxu0 0.0
    %162 = vmatpush1.msra.mxu0 0.0
    %163 = vmatprep.subr.mxu0 0.0
    %164 = vmatpush1.msra.mxu0 0.0
    %165 = vmatprep.subr.mxu0 0.0
    %166 = vmatpush1.msra.mxu0 0.0
    %167 = vmatprep.subr.mxu0 0.0
    %168 = vmatpush1.msra.mxu0 0.0
    %169 = vmatprep.subr.mxu0 0.0
    %170 = vmatpush1.msra.mxu0 0.0
    %171 = vmatprep.subr.mxu0 0.0
    %172 = vmatpush1.msra.mxu0 0.0
    %173 = vmatprep.subr.mxu0 0.0
    %174 = vmatpush1.msra.mxu0 0.0
    %175 = vmatprep.subr.mxu0 0.0
    %176 = vmatpush1.msra.mxu0 0.0
    %177 = vmatprep.subr.mxu0 0.0
    %178 = vmatpush1.msra.mxu0 0.0
    %179 = vmatprep.subr.mxu0 0.0
    %180 = vmatpush1.msra.mxu0 0.0
    %181 = vmatprep.subr.mxu0 0.0
    %182 = vmatpush1.msra.mxu0 0.0
    %183 = vmatprep.mubr.f32.mxu0 0.0
    %184 = vmatmul.mubr.f32.gmra.mrb[0].mxu0 %v96
    %v185 = vpop.f32.mrb[0].mxu0
    %v186 = vadd.f32 %v92, %v185
    %v187 = vpop.f32.mrb[0].mxu0
    %188 = vmatprep.mubr.f32.mxu0 0.0
    %189 = vmatmul.mubr.f32.gmra.mrb[0].mxu0 %v99
    %v190 = vpop.f32.mrb[0].mxu0
    %v191 = vadd.f32 %v92, %v190
    %v192 = vpop.f32.mrb[0].mxu0
    %193 = vmatprep.mubr.f32.mxu0 0.0
    %194 = vmatmul.mubr.f32.gmra.mrb[0].mxu0 %v102
    %v195 = vpop.f32.mrb[0].mxu0
    %v196 = vadd.f32 %v92, %v195
    %v197 = vpop.f32.mrb[0].mxu0
    %198 = vmatprep.mubr.f32.mxu0 0.0
    %199 = vmatmul.mubr.f32.gmra.mrb[0].mxu0 %v105
    %v200 = vpop.f32.mrb[0].mxu0
    %v201 = vadd.f32 %v92, %v200
    %v202 = vpop.f32.mrb[0].mxu0
    %203 = vmatprep.mubr.f32.mxu0 0.0
    %204 = vmatmul.mubr.f32.gmra.mrb[0].mxu0 %v108
    %v205 = vpop.f32.mrb[0].mxu0
    %v206 = vadd.f32 %v92, %v205
    %v207 = vpop.f32.mrb[0].mxu0
    %208 = vmatprep.mubr.f32.mxu0 0.0
    %209 = vmatmul.mubr.f32.gmra.mrb[0].mxu0 %v111
    %v210 = vpop.f32.mrb[0].mxu0
    %v211 = vadd.f32 %v92, %v210
    %v212 = vpop.f32.mrb[0].mxu0
    %213 = vmatprep.mubr.f32.mxu0 0.0
    %214 = vmatmul.mubr.f32.gmra.mrb[0].mxu0 %v114
    %v215 = vpop.f32.mrb[0].mxu0
    %v216 = vadd.f32 %v92, %v215
    %v217 = vpop.f32.mrb[0].mxu0
    %218 = vmatprep.mubr.f32.mxu0 0.0
    %219 = vmatmul.mubr.f32.gmra.mrb[0].mxu0 %v117
    %v220 = vpop.f32.mrb[0].mxu0
    %v221 = vadd.f32 %v92, %v220
    %v222 = vpop.f32.mrb[0].mxu0
    %223 = vdwg.mxu0
    %224 = vst [vmem:[#allocation2] sm:$0xff] %v186
    %225 = vst [vmem:[#allocation2 + $0x8] sm:$0xff] %v191
    %226 = vst [vmem:[#allocation2 + $0x10] sm:$0xff] %v196
    %227 = vst [vmem:[#allocation2 + $0x18] sm:$0xff] %v201
    %228 = vst [vmem:[#allocation2 + $0x20] sm:$0xff] %v206
    %229 = vst [vmem:[#allocation2 + $0x28] sm:$0xff] %v211
    %230 = vst [vmem:[#allocation2 + $0x30] sm:$0xff] %v216
    %231 = vst [vmem:[#allocation2 + $0x38] sm:$0xff] %v221
    %v232 = vld [vmem:[%s7] sm:$0x1]
    %v234 = vlaneseq
    %v235 = vshrl.u32 %v234, 7
    %v236 = vsub.s32 0, %v235
    %v237 = vrot.slane %v232, %v236
    %v239 = vld [vmem:[%s1] sm:$0xff]
    %s240 = scalar_lea.vmem %s1, 8
    %v241 = vld [vmem:[%s240] sm:$0xff]
    %v242 = vld [vmem:[#allocation2] sm:$0xff]
    %v243 = vld [vmem:[#allocation5] sm:$0xff]
    %v244 = vld [vmem:[#allocation5 + $0x8] sm:$0xff]
    %v245 = vld [vmem:[#allocation5 + $0x10] sm:$0xff]
    %v246 = vld [vmem:[#allocation5 + $0x18] sm:$0xff]
    %v247 = vld [vmem:[#allocation5 + $0x20] sm:$0xff]
    %v248 = vld [vmem:[#allocation5 + $0x28] sm:$0xff]
    %v249 = vld [vmem:[#allocation5 + $0x30] sm:$0xff]
    %v250 = vld [vmem:[#allocation5 + $0x38] sm:$0xff]
    %v251 = vld [vmem:[#allocation5 + $0x40] sm:$0xff]
    %v252 = vld [vmem:[#allocation5 + $0x48] sm:$0xff]
    %v253 = vld [vmem:[#allocation5 + $0x50] sm:$0xff]
    %v254 = vld [vmem:[#allocation5 + $0x58] sm:$0xff]
    %v255 = vld [vmem:[#allocation5 + $0x60] sm:$0xff]
    %v256 = vld [vmem:[#allocation5 + $0x68] sm:$0xff]
    %v257 = vld [vmem:[#allocation5 + $0x70] sm:$0xff]
    %v258 = vld [vmem:[#allocation5 + $0x78] sm:$0xff]
    %259 = vmatprep.subr.mxu0 0.0
    %260 = vmatpush1.msra.mxu0 %v243
    %261 = vmatprep.subr.mxu0 0.0
    %262 = vmatpush1.msra.mxu0 %v244
    %263 = vmatprep.subr.mxu0 0.0
    %264 = vmatpush1.msra.mxu0 %v245
    %265 = vmatprep.subr.mxu0 0.0
    %266 = vmatpush1.msra.mxu0 %v246
    %267 = vmatprep.subr.mxu0 0.0
    %268 = vmatpush1.msra.mxu0 %v247
    %269 = vmatprep.subr.mxu0 0.0
    %270 = vmatpush1.msra.mxu0 %v248
    %271 = vmatprep.subr.mxu0 0.0
    %272 = vmatpush1.msra.mxu0 %v249
    %273 = vmatprep.subr.mxu0 0.0
    %274 = vmatpush1.msra.mxu0 %v250
    %275 = vmatprep.subr.mxu0 0.0
    %276 = vmatpush1.msra.mxu0 %v251
    %277 = vmatprep.subr.mxu0 0.0
    %278 = vmatpush1.msra.mxu0 %v252
    %279 = vmatprep.subr.mxu0 0.0
    %280 = vmatpush1.msra.mxu0 %v253
    %281 = vmatprep.subr.mxu0 0.0
    %282 = vmatpush1.msra.mxu0 %v254
    %283 = vmatprep.subr.mxu0 0.0
    %284 = vmatpush1.msra.mxu0 %v255
    %285 = vmatprep.subr.mxu0 0.0
    %286 = vmatpush1.msra.mxu0 %v256
    %287 = vmatprep.subr.mxu0 0.0
    %288 = vmatpush1.msra.mxu0 %v257
    %289 = vmatprep.subr.mxu0 0.0
    %290 = vmatpush1.msra.mxu0 %v258
    %291 = vmatprep.subr.mxu0 0.0
    %292 = vmatpush1.msra.mxu0 0.0
    %293 = vmatprep.subr.mxu0 0.0
    %294 = vmatpush1.msra.mxu0 0.0
    %295 = vmatprep.subr.mxu0 0.0
    %296 = vmatpush1.msra.mxu0 0.0
    %297 = vmatprep.subr.mxu0 0.0
    %298 = vmatpush1.msra.mxu0 0.0
    %299 = vmatprep.subr.mxu0 0.0
    %300 = vmatpush1.msra.mxu0 0.0
    %301 = vmatprep.subr.mxu0 0.0
    %302 = vmatpush1.msra.mxu0 0.0
    %303 = vmatprep.subr.mxu0 0.0
    %304 = vmatpush1.msra.mxu0 0.0
    %305 = vmatprep.subr.mxu0 0.0
    %306 = vmatpush1.msra.mxu0 0.0
    %307 = vmatprep.subr.mxu0 0.0
    %308 = vmatpush1.msra.mxu0 0.0
    %309 = vmatprep.subr.mxu0 0.0
    %310 = vmatpush1.msra.mxu0 0.0
    %311 = vmatprep.subr.mxu0 0.0
    %312 = vmatpush1.msra.mxu0 0.0
    %313 = vmatprep.subr.mxu0 0.0
    %314 = vmatpush1.msra.mxu0 0.0
    %315 = vmatprep.subr.mxu0 0.0
    %316 = vmatpush1.msra.mxu0 0.0
    %317 = vmatprep.subr.mxu0 0.0
    %318 = vmatpush1.msra.mxu0 0.0
    %319 = vmatprep.subr.mxu0 0.0
    %320 = vmatpush1.msra.mxu0 0.0
    %321 = vmatprep.subr.mxu0 0.0
    %322 = vmatpush1.msra.mxu0 0.0
    %323 = vmatprep.mubr.f32.mxu0 0.0
    %324 = vmatmul.mubr.f32.gmra.mrb[0].mxu0 %v241
    %v325 = vpop.f32.mrb[0].mxu0
    %v326 = vadd.f32 %v237, %v325
    %v327 = vpop.f32.mrb[0].mxu0
    %328 = vdwg.mxu0
    %v329 = vld [vmem:[%s3] sm:$0xff]
    %v330 = vld [vmem:[%s3 + $0x8] sm:$0xff]
    %v331 = vld [vmem:[%s3 + $0x10] sm:$0xff]
    %v332 = vld [vmem:[%s3 + $0x18] sm:$0xff]
    %v333 = vld [vmem:[%s3 + $0x20] sm:$0xff]
    %v334 = vld [vmem:[%s3 + $0x28] sm:$0xff]
    %v335 = vld [vmem:[%s3 + $0x30] sm:$0xff]
    %v336 = vld [vmem:[%s3 + $0x38] sm:$0xff]
    %v337 = vld [vmem:[%s3 + $0x40] sm:$0xff]
    %v338 = vld [vmem:[%s3 + $0x48] sm:$0xff]
    %v339 = vld [vmem:[%s3 + $0x50] sm:$0xff]
    %v340 = vld [vmem:[%s3 + $0x58] sm:$0xff]
    %v341 = vld [vmem:[%s3 + $0x60] sm:$0xff]
    %v342 = vld [vmem:[%s3 + $0x68] sm:$0xff]
    %v343 = vld [vmem:[%s3 + $0x70] sm:$0xff]
    %v344 = vld [vmem:[%s3 + $0x78] sm:$0xff]
    %345 = vmatprep.subr.mxu0 0.0
    %346 = vmatpush1.msra.mxu0 %v329
    %347 = vmatprep.subr.mxu0 0.0
    %348 = vmatpush1.msra.mxu0 %v330
    %349 = vmatprep.subr.mxu0 0.0
    %350 = vmatpush1.msra.mxu0 %v331
    %351 = vmatprep.subr.mxu0 0.0
    %352 = vmatpush1.msra.mxu0 %v332
    %353 = vmatprep.subr.mxu0 0.0
    %354 = vmatpush1.msra.mxu0 %v333
    %355 = vmatprep.subr.mxu0 0.0
    %356 = vmatpush1.msra.mxu0 %v334
    %357 = vmatprep.subr.mxu0 0.0
    %358 = vmatpush1.msra.mxu0 %v335
    %359 = vmatprep.subr.mxu0 0.0
    %360 = vmatpush1.msra.mxu0 %v336
    %361 = vmatprep.subr.mxu0 0.0
    %362 = vmatpush1.msra.mxu0 %v337
    %363 = vmatprep.subr.mxu0 0.0
    %364 = vmatpush1.msra.mxu0 %v338
    %365 = vmatprep.subr.mxu0 0.0
    %366 = vmatpush1.msra.mxu0 %v339
    %367 = vmatprep.subr.mxu0 0.0
    %368 = vmatpush1.msra.mxu0 %v340
    %369 = vmatprep.subr.mxu0 0.0
    %370 = vmatpush1.msra.mxu0 %v341
    %371 = vmatprep.subr.mxu0 0.0
    %372 = vmatpush1.msra.mxu0 %v342
    %373 = vmatprep.subr.mxu0 0.0
    %374 = vmatpush1.msra.mxu0 %v343
    %375 = vmatprep.subr.mxu0 0.0
    %376 = vmatpush1.msra.mxu0 %v344
    %377 = vmatprep.subr.mxu0 0.0
    %378 = vmatpush1.msra.mxu0 0.0
    %379 = vmatprep.subr.mxu0 0.0
    %380 = vmatpush1.msra.mxu0 0.0
    %381 = vmatprep.subr.mxu0 0.0
    %382 = vmatpush1.msra.mxu0 0.0
    %383 = vmatprep.subr.mxu0 0.0
    %384 = vmatpush1.msra.mxu0 0.0
    %385 = vmatprep.subr.mxu0 0.0
    %386 = vmatpush1.msra.mxu0 0.0
    %387 = vmatprep.subr.mxu0 0.0
    %388 = vmatpush1.msra.mxu0 0.0
    %389 = vmatprep.subr.mxu0 0.0
    %390 = vmatpush1.msra.mxu0 0.0
    %391 = vmatprep.subr.mxu0 0.0
    %392 = vmatpush1.msra.mxu0 0.0
    %393 = vmatprep.subr.mxu0 0.0
    %394 = vmatpush1.msra.mxu0 0.0
    %395 = vmatprep.subr.mxu0 0.0
    %396 = vmatpush1.msra.mxu0 0.0
    %397 = vmatprep.subr.mxu0 0.0
    %398 = vmatpush1.msra.mxu0 0.0
    %399 = vmatprep.subr.mxu0 0.0
    %400 = vmatpush1.msra.mxu0 0.0
    %401 = vmatprep.subr.mxu0 0.0
    %402 = vmatpush1.msra.mxu0 0.0
    %403 = vmatprep.subr.mxu0 0.0
    %404 = vmatpush1.msra.mxu0 0.0
    %405 = vmatprep.subr.mxu0 0.0
    %406 = vmatpush1.msra.mxu0 0.0
    %407 = vmatprep.subr.mxu0 0.0
    %408 = vmatpush1.msra.mxu0 0.0
    %409 = vmatprep.mubr.f32.mxu0 0.0
    %410 = vmatmul.mubr.f32.gmra.mrb[0].mxu0 %v239
    %v411 = vpop.f32.mrb[0].mxu0
    %v412 = vadd.f32 0.0, %v411
    %v413 = vpop.f32.mrb[0].mxu0
    %414 = vdwg.mxu0
    %v415 = vadd.f32 %v242, %v412
    %v416 = vtanh.pop %v415
    %v417 = vld [vmem:[#allocation3] sm:$0xff]
    %v418 = vld [vmem:[#allocation3 + $0x8] sm:$0xff]
    %v419 = vld [vmem:[#allocation3 + $0x10] sm:$0xff]
    %v420 = vld [vmem:[#allocation3 + $0x18] sm:$0xff]
    %v421 = vld [vmem:[#allocation3 + $0x20] sm:$0xff]
    %v422 = vld [vmem:[#allocation3 + $0x28] sm:$0xff]
    %v423 = vld [vmem:[#allocation3 + $0x30] sm:$0xff]
    %v424 = vld [vmem:[#allocation3 + $0x38] sm:$0xff]
    %v425 = vld [vmem:[#allocation3 + $0x40] sm:$0xff]
    %v426 = vld [vmem:[#allocation3 + $0x48] sm:$0xff]
    %v427 = vld [vmem:[#allocation3 + $0x50] sm:$0xff]
    %v428 = vld [vmem:[#allocation3 + $0x58] sm:$0xff]
    %v429 = vld [vmem:[#allocation3 + $0x60] sm:$0xff]
    %v430 = vld [vmem:[#allocation3 + $0x68] sm:$0xff]
    %v431 = vld [vmem:[#allocation3 + $0x70] sm:$0xff]
    %v432 = vld [vmem:[#allocation3 + $0x78] sm:$0xff]
    %433 = vmatprep.subr.mxu0 0.0
    %434 = vmatpush1.msra.mxu0 %v417
    %435 = vmatprep.subr.mxu0 0.0
    %436 = vmatpush1.msra.mxu0 %v418
    %437 = vmatprep.subr.mxu0 0.0
    %438 = vmatpush1.msra.mxu0 %v419
    %439 = vmatprep.subr.mxu0 0.0
    %440 = vmatpush1.msra.mxu0 %v420
    %441 = vmatprep.subr.mxu0 0.0
    %442 = vmatpush1.msra.mxu0 %v421
    %443 = vmatprep.subr.mxu0 0.0
    %444 = vmatpush1.msra.mxu0 %v422
    %445 = vmatprep.subr.mxu0 0.0
    %446 = vmatpush1.msra.mxu0 %v423
    %447 = vmatprep.subr.mxu0 0.0
    %448 = vmatpush1.msra.mxu0 %v424
    %449 = vmatprep.subr.mxu0 0.0
    %450 = vmatpush1.msra.mxu0 %v425
    %451 = vmatprep.subr.mxu0 0.0
    %452 = vmatpush1.msra.mxu0 %v426
    %453 = vmatprep.subr.mxu0 0.0
    %454 = vmatpush1.msra.mxu0 %v427
    %455 = vmatprep.subr.mxu0 0.0
    %456 = vmatpush1.msra.mxu0 %v428
    %457 = vmatprep.subr.mxu0 0.0
    %458 = vmatpush1.msra.mxu0 %v429
    %459 = vmatprep.subr.mxu0 0.0
    %460 = vmatpush1.msra.mxu0 %v430
    %461 = vmatprep.subr.mxu0 0.0
    %462 = vmatpush1.msra.mxu0 %v431
    %463 = vmatprep.subr.mxu0 0.0
    %464 = vmatpush1.msra.mxu0 %v432
    %465 = vmatprep.subr.mxu0 0.0
    %466 = vmatpush1.msra.mxu0 0.0
    %467 = vmatprep.subr.mxu0 0.0
    %468 = vmatpush1.msra.mxu0 0.0
    %469 = vmatprep.subr.mxu0 0.0
    %470 = vmatpush1.msra.mxu0 0.0
    %471 = vmatprep.subr.mxu0 0.0
    %472 = vmatpush1.msra.mxu0 0.0
    %473 = vmatprep.subr.mxu0 0.0
    %474 = vmatpush1.msra.mxu0 0.0
    %475 = vmatprep.subr.mxu0 0.0
    %476 = vmatpush1.msra.mxu0 0.0
    %477 = vmatprep.subr.mxu0 0.0
    %478 = vmatpush1.msra.mxu0 0.0
    %479 = vmatprep.subr.mxu0 0.0
    %480 = vmatpush1.msra.mxu0 0.0
    %481 = vmatprep.subr.mxu0 0.0
    %482 = vmatpush1.msra.mxu0 0.0
    %483 = vmatprep.subr.mxu0 0.0
    %484 = vmatpush1.msra.mxu0 0.0
    %485 = vmatprep.subr.mxu0 0.0
    %486 = vmatpush1.msra.mxu0 0.0
    %487 = vmatprep.subr.mxu0 0.0
    %488 = vmatpush1.msra.mxu0 0.0
    %489 = vmatprep.subr.mxu0 0.0
    %490 = vmatpush1.msra.mxu0 0.0
    %491 = vmatprep.subr.mxu0 0.0
    %492 = vmatpush1.msra.mxu0 0.0
    %493 = vmatprep.subr.mxu0 0.0
    %494 = vmatpush1.msra.mxu0 0.0
    %495 = vmatprep.subr.mxu0 0.0
    %496 = vmatpush1.msra.mxu0 0.0
    %497 = vmatprep.mubr.f32.mxu0 0.0
    %498 = vmatmul.mubr.f32.gmra.mrb[0].mxu0 %v416
    %v499 = vpop.f32.mrb[0].mxu0
    %v500 = vadd.f32 %v326, %v499
    %v501 = vpop.f32.mrb[0].mxu0
    %502 = vdwg.mxu0
    %v503 = vtanh.pop %v500
    %s504 = scalar_lea.vmem [#allocation2], 8
    %v505 = vld [vmem:[%s504] sm:$0xff]
    %506 = vmatprep.subr.mxu0 0.0
    %507 = vmatpush1.msra.mxu0 %v243
    %508 = vmatprep.subr.mxu0 0.0
    %509 = vmatpush1.msra.mxu0 %v244
    %510 = vmatprep.subr.mxu0 0.0
    %511 = vmatpush1.msra.mxu0 %v245
    %512 = vmatprep.subr.mxu0 0.0
    %513 = vmatpush1.msra.mxu0 %v246
    %514 = vmatprep.subr.mxu0 0.0
    %515 = vmatpush1.msra.mxu0 %v247
    %516 = vmatprep.subr.mxu0 0.0
    %517 = vmatpush1.msra.mxu0 %v248
    %518 = vmatprep.subr.mxu0 0.0
    %519 = vmatpush1.msra.mxu0 %v249
    %520 = vmatprep.subr.mxu0 0.0
    %521 = vmatpush1.msra.mxu0 %v250
    %522 = vmatprep.subr.mxu0 0.0
    %523 = vmatpush1.msra.mxu0 %v251
    %524 = vmatprep.subr.mxu0 0.0
    %525 = vmatpush1.msra.mxu0 %v252
    %526 = vmatprep.subr.mxu0 0.0
    %527 = vmatpush1.msra.mxu0 %v253
    %528 = vmatprep.subr.mxu0 0.0
    %529 = vmatpush1.msra.mxu0 %v254
    %530 = vmatprep.subr.mxu0 0.0
    %531 = vmatpush1.msra.mxu0 %v255
    %532 = vmatprep.subr.mxu0 0.0
    %533 = vmatpush1.msra.mxu0 %v256
    %534 = vmatprep.subr.mxu0 0.0
    %535 = vmatpush1.msra.mxu0 %v257
    %536 = vmatprep.subr.mxu0 0.0
    %537 = vmatpush1.msra.mxu0 %v258
    %538 = vmatprep.subr.mxu0 0.0
    %539 = vmatpush1.msra.mxu0 0.0
    %540 = vmatprep.subr.mxu0 0.0
    %541 = vmatpush1.msra.mxu0 0.0
    %542 = vmatprep.subr.mxu0 0.0
    %543 = vmatpush1.msra.mxu0 0.0
    %544 = vmatprep.subr.mxu0 0.0
    %545 = vmatpush1.msra.mxu0 0.0
    %546 = vmatprep.subr.mxu0 0.0
    %547 = vmatpush1.msra.mxu0 0.0
    %548 = vmatprep.subr.mxu0 0.0
    %549 = vmatpush1.msra.mxu0 0.0
    %550 = vmatprep.subr.mxu0 0.0
    %551 = vmatpush1.msra.mxu0 0.0
    %552 = vmatprep.subr.mxu0 0.0
    %553 = vmatpush1.msra.mxu0 0.0
    %554 = vmatprep.subr.mxu0 0.0
    %555 = vmatpush1.msra.mxu0 0.0
    %556 = vmatprep.subr.mxu0 0.0
    %557 = vmatpush1.msra.mxu0 0.0
    %558 = vmatprep.subr.mxu0 0.0
    %559 = vmatpush1.msra.mxu0 0.0
    %560 = vmatprep.subr.mxu0 0.0
    %561 = vmatpush1.msra.mxu0 0.0
    %562 = vmatprep.subr.mxu0 0.0
    %563 = vmatpush1.msra.mxu0 0.0
    %564 = vmatprep.subr.mxu0 0.0
    %565 = vmatpush1.msra.mxu0 0.0
    %566 = vmatprep.subr.mxu0 0.0
    %567 = vmatpush1.msra.mxu0 0.0
    %568 = vmatprep.subr.mxu0 0.0
    %569 = vmatpush1.msra.mxu0 0.0
    %570 = vmatprep.mubr.f32.mxu0 0.0
    %571 = vmatmul.mubr.f32.gmra.mrb[0].mxu0 %v503
    %v572 = vpop.f32.mrb[0].mxu0
    %v573 = vadd.f32 %v237, %v572
    %v574 = vpop.f32.mrb[0].mxu0
    %575 = vdwg.mxu0
    %576 = vmatprep.subr.mxu0 0.0
    %577 = vmatpush1.msra.mxu0 %v329
    %578 = vmatprep.subr.mxu0 0.0
    %579 = vmatpush1.msra.mxu0 %v330
    %580 = vmatprep.subr.mxu0 0.0
    %581 = vmatpush1.msra.mxu0 %v331
    %582 = vmatprep.subr.mxu0 0.0
    %583 = vmatpush1.msra.mxu0 %v332
    %584 = vmatprep.subr.mxu0 0.0
    %585 = vmatpush1.msra.mxu0 %v333
    %586 = vmatprep.subr.mxu0 0.0
    %587 = vmatpush1.msra.mxu0 %v334
    %588 = vmatprep.subr.mxu0 0.0
    %589 = vmatpush1.msra.mxu0 %v335
    %590 = vmatprep.subr.mxu0 0.0
    %591 = vmatpush1.msra.mxu0 %v336
    %592 = vmatprep.subr.mxu0 0.0
    %593 = vmatpush1.msra.mxu0 %v337
    %594 = vmatprep.subr.mxu0 0.0
    %595 = vmatpush1.msra.mxu0 %v338
    %596 = vmatprep.subr.mxu0 0.0
    %597 = vmatpush1.msra.mxu0 %v339
    %598 = vmatprep.subr.mxu0 0.0
    %599 = vmatpush1.msra.mxu0 %v340
    %600 = vmatprep.subr.mxu0 0.0
    %601 = vmatpush1.msra.mxu0 %v341
    %602 = vmatprep.subr.mxu0 0.0
    %603 = vmatpush1.msra.mxu0 %v342
    %604 = vmatprep.subr.mxu0 0.0
    %605 = vmatpush1.msra.mxu0 %v343
    %606 = vmatprep.subr.mxu0 0.0
    %607 = vmatpush1.msra.mxu0 %v344
    %608 = vmatprep.subr.mxu0 0.0
    %609 = vmatpush1.msra.mxu0 0.0
    %610 = vmatprep.subr.mxu0 0.0
    %611 = vmatpush1.msra.mxu0 0.0
    %612 = vmatprep.subr.mxu0 0.0
    %613 = vmatpush1.msra.mxu0 0.0
    %614 = vmatprep.subr.mxu0 0.0
    %615 = vmatpush1.msra.mxu0 0.0
    %616 = vmatprep.subr.mxu0 0.0
    %617 = vmatpush1.msra.mxu0 0.0
    %618 = vmatprep.subr.mxu0 0.0
    %619 = vmatpush1.msra.mxu0 0.0
    %620 = vmatprep.subr.mxu0 0.0
    %621 = vmatpush1.msra.mxu0 0.0
    %622 = vmatprep.subr.mxu0 0.0
    %623 = vmatpush1.msra.mxu0 0.0
    %624 = vmatprep.subr.mxu0 0.0
    %625 = vmatpush1.msra.mxu0 0.0
    %626 = vmatprep.subr.mxu0 0.0
    %627 = vmatpush1.msra.mxu0 0.0
    %628 = vmatprep.subr.mxu0 0.0
    %629 = vmatpush1.msra.mxu0 0.0
    %630 = vmatprep.subr.mxu0 0.0
    %631 = vmatpush1.msra.mxu0 0.0
    %632 = vmatprep.subr.mxu0 0.0
    %633 = vmatpush1.msra.mxu0 0.0
    %634 = vmatprep.subr.mxu0 0.0
    %635 = vmatpush1.msra.mxu0 0.0
    %636 = vmatprep.subr.mxu0 0.0
    %637 = vmatpush1.msra.mxu0 0.0
    %638 = vmatprep.subr.mxu0 0.0
    %639 = vmatpush1.msra.mxu0 0.0
    %640 = vmatprep.mubr.f32.mxu0 0.0
    %641 = vmatmul.mubr.f32.gmra.mrb[0].mxu0 %v416
    %v642 = vpop.f32.mrb[0].mxu0
    %v643 = vadd.f32 0.0, %v642
    %v644 = vpop.f32.mrb[0].mxu0
    %645 = vdwg.mxu0
    %v646 = vadd.f32 %v505, %v643
    %v647 = vtanh.pop %v646
    %648 = vmatprep.subr.mxu0 0.0
    %649 = vmatpush1.msra.mxu0 %v417
    %650 = vmatprep.subr.mxu0 0.0
    %651 = vmatpush1.msra.mxu0 %v418
    %652 = vmatprep.subr.mxu0 0.0
    %653 = vmatpush1.msra.mxu0 %v419
    %654 = vmatprep.subr.mxu0 0.0
    %655 = vmatpush1.msra.mxu0 %v420
    %656 = vmatprep.subr.mxu0 0.0
    %657 = vmatpush1.msra.mxu0 %v421
    %658 = vmatprep.subr.mxu0 0.0
    %659 = vmatpush1.msra.mxu0 %v422
    %660 = vmatprep.subr.mxu0 0.0
    %661 = vmatpush1.msra.mxu0 %v423
    %662 = vmatprep.subr.mxu0 0.0
    %663 = vmatpush1.msra.mxu0 %v424
    %664 = vmatprep.subr.mxu0 0.0
    %665 = vmatpush1.msra.mxu0 %v425
    %666 = vmatprep.subr.mxu0 0.0
    %667 = vmatpush1.msra.mxu0 %v426
    %668 = vmatprep.subr.mxu0 0.0
    %669 = vmatpush1.msra.mxu0 %v427
    %670 = vmatprep.subr.mxu0 0.0
    %671 = vmatpush1.msra.mxu0 %v428
    %672 = vmatprep.subr.mxu0 0.0
    %673 = vmatpush1.msra.mxu0 %v429
    %674 = vmatprep.subr.mxu0 0.0
    %675 = vmatpush1.msra.mxu0 %v430
    %676 = vmatprep.subr.mxu0 0.0
    %677 = vmatpush1.msra.mxu0 %v431
    %678 = vmatprep.subr.mxu0 0.0
    %679 = vmatpush1.msra.mxu0 %v432
    %680 = vmatprep.subr.mxu0 0.0
    %681 = vmatpush1.msra.mxu0 0.0
    %682 = vmatprep.subr.mxu0 0.0
    %683 = vmatpush1.msra.mxu0 0.0
    %684 = vmatprep.subr.mxu0 0.0
    %685 = vmatpush1.msra.mxu0 0.0
    %686 = vmatprep.subr.mxu0 0.0
    %687 = vmatpush1.msra.mxu0 0.0
    %688 = vmatprep.subr.mxu0 0.0
    %689 = vmatpush1.msra.mxu0 0.0
    %690 = vmatprep.subr.mxu0 0.0
    %691 = vmatpush1.msra.mxu0 0.0
    %692 = vmatprep.subr.mxu0 0.0
    %693 = vmatpush1.msra.mxu0 0.0
    %694 = vmatprep.subr.mxu0 0.0
    %695 = vmatpush1.msra.mxu0 0.0
    %696 = vmatprep.subr.mxu0 0.0
    %697 = vmatpush1.msra.mxu0 0.0
    %698 = vmatprep.subr.mxu0 0.0
    %699 = vmatpush1.msra.mxu0 0.0
    %700 = vmatprep.subr.mxu0 0.0
    %701 = vmatpush1.msra.mxu0 0.0
    %702 = vmatprep.subr.mxu0 0.0
    %703 = vmatpush1.msra.mxu0 0.0
    %704 = vmatprep.subr.mxu0 0.0
    %705 = vmatpush1.msra.mxu0 0.0
    %706 = vmatprep.subr.mxu0 0.0
    %707 = vmatpush1.msra.mxu0 0.0
    %708 = vmatprep.subr.mxu0 0.0
    %709 = vmatpush1.msra.mxu0 0.0
    %710 = vmatprep.subr.mxu0 0.0
    %711 = vmatpush1.msra.mxu0 0.0
    %712 = vmatprep.mubr.f32.mxu0 0.0
    %713 = vmatmul.mubr.f32.gmra.mrb[0].mxu0 %v647
    %v714 = vpop.f32.mrb[0].mxu0
    %v715 = vadd.f32 %v573, %v714
    %v716 = vpop.f32.mrb[0].mxu0
    %717 = vdwg.mxu0
    %v718 = vtanh.pop %v715
    %s719 = scalar_lea.vmem [#allocation2], 16
    %v720 = vld [vmem:[%s719] sm:$0xff]
    %721 = vmatprep.subr.mxu0 0.0
    %722 = vmatpush1.msra.mxu0 %v243
    %723 = vmatprep.subr.mxu0 0.0
    %724 = vmatpush1.msra.mxu0 %v244
    %725 = vmatprep.subr.mxu0 0.0
    %726 = vmatpush1.msra.mxu0 %v245
    %727 = vmatprep.subr.mxu0 0.0
    %728 = vmatpush1.msra.mxu0 %v246
    %729 = vmatprep.subr.mxu0 0.0
    %730 = vmatpush1.msra.mxu0 %v247
    %731 = vmatprep.subr.mxu0 0.0
    %732 = vmatpush1.msra.mxu0 %v248
    %733 = vmatprep.subr.mxu0 0.0
    %734 = vmatpush1.msra.mxu0 %v249
    %735 = vmatprep.subr.mxu0 0.0
    %736 = vmatpush1.msra.mxu0 %v250
    %737 = vmatprep.subr.mxu0 0.0
    %738 = vmatpush1.msra.mxu0 %v251
    %739 = vmatprep.subr.mxu0 0.0
    %740 = vmatpush1.msra.mxu0 %v252
    %741 = vmatprep.subr.mxu0 0.0
    %742 = vmatpush1.msra.mxu0 %v253
    %743 = vmatprep.subr.mxu0 0.0
    %744 = vmatpush1.msra.mxu0 %v254
    %745 = vmatprep.subr.mxu0 0.0
    %746 = vmatpush1.msra.mxu0 %v255
    %747 = vmatprep.subr.mxu0 0.0
    %748 = vmatpush1.msra.mxu0 %v256
    %749 = vmatprep.subr.mxu0 0.0
    %750 = vmatpush1.msra.mxu0 %v257
    %751 = vmatprep.subr.mxu0 0.0
    %752 = vmatpush1.msra.mxu0 %v258
    %753 = vmatprep.subr.mxu0 0.0
    %754 = vmatpush1.msra.mxu0 0.0
    %755 = vmatprep.subr.mxu0 0.0
    %756 = vmatpush1.msra.mxu0 0.0
    %757 = vmatprep.subr.mxu0 0.0
    %758 = vmatpush1.msra.mxu0 0.0
    %759 = vmatprep.subr.mxu0 0.0
    %760 = vmatpush1.msra.mxu0 0.0
    %761 = vmatprep.subr.mxu0 0.0
    %762 = vmatpush1.msra.mxu0 0.0
    %763 = vmatprep.subr.mxu0 0.0
    %764 = vmatpush1.msra.mxu0 0.0
    %765 = vmatprep.subr.mxu0 0.0
    %766 = vmatpush1.msra.mxu0 0.0
    %767 = vmatprep.subr.mxu0 0.0
    %768 = vmatpush1.msra.mxu0 0.0
    %769 = vmatprep.subr.mxu0 0.0
    %770 = vmatpush1.msra.mxu0 0.0
    %771 = vmatprep.subr.mxu0 0.0
    %772 = vmatpush1.msra.mxu0 0.0
    %773 = vmatprep.subr.mxu0 0.0
    %774 = vmatpush1.msra.mxu0 0.0
    %775 = vmatprep.subr.mxu0 0.0
    %776 = vmatpush1.msra.mxu0 0.0
    %777 = vmatprep.subr.mxu0 0.0
    %778 = vmatpush1.msra.mxu0 0.0
    %779 = vmatprep.subr.mxu0 0.0
    %780 = vmatpush1.msra.mxu0 0.0
    %781 = vmatprep.subr.mxu0 0.0
    %782 = vmatpush1.msra.mxu0 0.0
    %783 = vmatprep.subr.mxu0 0.0
    %784 = vmatpush1.msra.mxu0 0.0
    %785 = vmatprep.mubr.f32.mxu0 0.0
    %786 = vmatmul.mubr.f32.gmra.mrb[0].mxu0 %v718
    %v787 = vpop.f32.mrb[0].mxu0
    %v788 = vadd.f32 %v237, %v787
    %v789 = vpop.f32.mrb[0].mxu0
    %790 = vdwg.mxu0
    %791 = vmatprep.subr.mxu0 0.0
    %792 = vmatpush1.msra.mxu0 %v329
    %793 = vmatprep.subr.mxu0 0.0
    %794 = vmatpush1.msra.mxu0 %v330
    %795 = vmatprep.subr.mxu0 0.0
    %796 = vmatpush1.msra.mxu0 %v331
    %797 = vmatprep.subr.mxu0 0.0
    %798 = vmatpush1.msra.mxu0 %v332
    %799 = vmatprep.subr.mxu0 0.0
    %800 = vmatpush1.msra.mxu0 %v333
    %801 = vmatprep.subr.mxu0 0.0
    %802 = vmatpush1.msra.mxu0 %v334
    %803 = vmatprep.subr.mxu0 0.0
    %804 = vmatpush1.msra.mxu0 %v335
    %805 = vmatprep.subr.mxu0 0.0
    %806 = vmatpush1.msra.mxu0 %v336
    %807 = vmatprep.subr.mxu0 0.0
    %808 = vmatpush1.msra.mxu0 %v337
    %809 = vmatprep.subr.mxu0 0.0
    %810 = vmatpush1.msra.mxu0 %v338
    %811 = vmatprep.subr.mxu0 0.0
    %812 = vmatpush1.msra.mxu0 %v339
    %813 = vmatprep.subr.mxu0 0.0
    %814 = vmatpush1.msra.mxu0 %v340
    %815 = vmatprep.subr.mxu0 0.0
    %816 = vmatpush1.msra.mxu0 %v341
    %817 = vmatprep.subr.mxu0 0.0
    %818 = vmatpush1.msra.mxu0 %v342
    %819 = vmatprep.subr.mxu0 0.0
    %820 = vmatpush1.msra.mxu0 %v343
    %821 = vmatprep.subr.mxu0 0.0
    %822 = vmatpush1.msra.mxu0 %v344
    %823 = vmatprep.subr.mxu0 0.0
    %824 = vmatpush1.msra.mxu0 0.0
    %825 = vmatprep.subr.mxu0 0.0
    %826 = vmatpush1.msra.mxu0 0.0
    %827 = vmatprep.subr.mxu0 0.0
    %828 = vmatpush1.msra.mxu0 0.0
    %829 = vmatprep.subr.mxu0 0.0
    %830 = vmatpush1.msra.mxu0 0.0
    %831 = vmatprep.subr.mxu0 0.0
    %832 = vmatpush1.msra.mxu0 0.0
    %833 = vmatprep.subr.mxu0 0.0
    %834 = vmatpush1.msra.mxu0 0.0
    %835 = vmatprep.subr.mxu0 0.0
    %836 = vmatpush1.msra.mxu0 0.0
    %837 = vmatprep.subr.mxu0 0.0
    %838 = vmatpush1.msra.mxu0 0.0
    %839 = vmatprep.subr.mxu0 0.0
    %840 = vmatpush1.msra.mxu0 0.0
    %841 = vmatprep.subr.mxu0 0.0
    %842 = vmatpush1.msra.mxu0 0.0
    %843 = vmatprep.subr.mxu0 0.0
    %844 = vmatpush1.msra.mxu0 0.0
    %845 = vmatprep.subr.mxu0 0.0
    %846 = vmatpush1.msra.mxu0 0.0
    %847 = vmatprep.subr.mxu0 0.0
    %848 = vmatpush1.msra.mxu0 0.0
    %849 = vmatprep.subr.mxu0 0.0
    %850 = vmatpush1.msra.mxu0 0.0
    %851 = vmatprep.subr.mxu0 0.0
    %852 = vmatpush1.msra.mxu0 0.0
    %853 = vmatprep.subr.mxu0 0.0
    %854 = vmatpush1.msra.mxu0 0.0
    %855 = vmatprep.mubr.f32.mxu0 0.0
    %856 = vmatmul.mubr.f32.gmra.mrb[0].mxu0 %v647
    %v857 = vpop.f32.mrb[0].mxu0
    %v858 = vadd.f32 0.0, %v857
    %v859 = vpop.f32.mrb[0].mxu0
    %860 = vdwg.mxu0
    %v861 = vadd.f32 %v720, %v858
    %v862 = vtanh.pop %v861
    %863 = vmatprep.subr.mxu0 0.0
    %864 = vmatpush1.msra.mxu0 %v417
    %865 = vmatprep.subr.mxu0 0.0
    %866 = vmatpush1.msra.mxu0 %v418
    %867 = vmatprep.subr.mxu0 0.0
    %868 = vmatpush1.msra.mxu0 %v419
    %869 = vmatprep.subr.mxu0 0.0
    %870 = vmatpush1.msra.mxu0 %v420
    %871 = vmatprep.subr.mxu0 0.0
    %872 = vmatpush1.msra.mxu0 %v421
    %873 = vmatprep.subr.mxu0 0.0
    %874 = vmatpush1.msra.mxu0 %v422
    %875 = vmatprep.subr.mxu0 0.0
    %876 = vmatpush1.msra.mxu0 %v423
    %877 = vmatprep.subr.mxu0 0.0
    %878 = vmatpush1.msra.mxu0 %v424
    %879 = vmatprep.subr.mxu0 0.0
    %880 = vmatpush1.msra.mxu0 %v425
    %881 = vmatprep.subr.mxu0 0.0
    %882 = vmatpush1.msra.mxu0 %v426
    %883 = vmatprep.subr.mxu0 0.0
    %884 = vmatpush1.msra.mxu0 %v427
    %885 = vmatprep.subr.mxu0 0.0
    %886 = vmatpush1.msra.mxu0 %v428
    %887 = vmatprep.subr.mxu0 0.0
    %888 = vmatpush1.msra.mxu0 %v429
    %889 = vmatprep.subr.mxu0 0.0
    %890 = vmatpush1.msra.mxu0 %v430
    %891 = vmatprep.subr.mxu0 0.0
    %892 = vmatpush1.msra.mxu0 %v431
    %893 = vmatprep.subr.mxu0 0.0
    %894 = vmatpush1.msra.mxu0 %v432
    %895 = vmatprep.subr.mxu0 0.0
    %896 = vmatpush1.msra.mxu0 0.0
    %897 = vmatprep.subr.mxu0 0.0
    %898 = vmatpush1.msra.mxu0 0.0
    %899 = vmatprep.subr.mxu0 0.0
    %900 = vmatpush1.msra.mxu0 0.0
    %901 = vmatprep.subr.mxu0 0.0
    %902 = vmatpush1.msra.mxu0 0.0
    %903 = vmatprep.subr.mxu0 0.0
    %904 = vmatpush1.msra.mxu0 0.0
    %905 = vmatprep.subr.mxu0 0.0
    %906 = vmatpush1.msra.mxu0 0.0
    %907 = vmatprep.subr.mxu0 0.0
    %908 = vmatpush1.msra.mxu0 0.0
    %909 = vmatprep.subr.mxu0 0.0
    %910 = vmatpush1.msra.mxu0 0.0
    %911 = vmatprep.subr.mxu0 0.0
    %912 = vmatpush1.msra.mxu0 0.0
    %913 = vmatprep.subr.mxu0 0.0
    %914 = vmatpush1.msra.mxu0 0.0
    %915 = vmatprep.subr.mxu0 0.0
    %916 = vmatpush1.msra.mxu0 0.0
    %917 = vmatprep.subr.mxu0 0.0
    %918 = vmatpush1.msra.mxu0 0.0
    %919 = vmatprep.subr.mxu0 0.0
    %920 = vmatpush1.msra.mxu0 0.0
    %921 = vmatprep.subr.mxu0 0.0
    %922 = vmatpush1.msra.mxu0 0.0
    %923 = vmatprep.subr.mxu0 0.0
    %924 = vmatpush1.msra.mxu0 0.0
    %925 = vmatprep.subr.mxu0 0.0
    %926 = vmatpush1.msra.mxu0 0.0
    %927 = vmatprep.mubr.f32.mxu0 0.0
    %928 = vmatmul.mubr.f32.gmra.mrb[0].mxu0 %v862
    %v929 = vpop.f32.mrb[0].mxu0
    %v930 = vadd.f32 %v788, %v929
    %v931 = vpop.f32.mrb[0].mxu0
    %932 = vdwg.mxu0
    %v933 = vtanh.pop %v930
    %s934 = scalar_lea.vmem [#allocation2], 24
    %v935 = vld [vmem:[%s934] sm:$0xff]
    %936 = vmatprep.subr.mxu0 0.0
    %937 = vmatpush1.msra.mxu0 %v243
    %938 = vmatprep.subr.mxu0 0.0
    %939 = vmatpush1.msra.mxu0 %v244
    %940 = vmatprep.subr.mxu0 0.0
    %941 = vmatpush1.msra.mxu0 %v245
    %942 = vmatprep.subr.mxu0 0.0
    %943 = vmatpush1.msra.mxu0 %v246
    %944 = vmatprep.subr.mxu0 0.0
    %945 = vmatpush1.msra.mxu0 %v247
    %946 = vmatprep.subr.mxu0 0.0
    %947 = vmatpush1.msra.mxu0 %v248
    %948 = vmatprep.subr.mxu0 0.0
    %949 = vmatpush1.msra.mxu0 %v249
    %950 = vmatprep.subr.mxu0 0.0
    %951 = vmatpush1.msra.mxu0 %v250
    %952 = vmatprep.subr.mxu0 0.0
    %953 = vmatpush1.msra.mxu0 %v251
    %954 = vmatprep.subr.mxu0 0.0
    %955 = vmatpush1.msra.mxu0 %v252
    %956 = vmatprep.subr.mxu0 0.0
    %957 = vmatpush1.msra.mxu0 %v253
    %958 = vmatprep.subr.mxu0 0.0
    %959 = vmatpush1.msra.mxu0 %v254
    %960 = vmatprep.subr.mxu0 0.0
    %961 = vmatpush1.msra.mxu0 %v255
    %962 = vmatprep.subr.mxu0 0.0
    %963 = vmatpush1.msra.mxu0 %v256
    %964 = vmatprep.subr.mxu0 0.0
    %965 = vmatpush1.msra.mxu0 %v257
    %966 = vmatprep.subr.mxu0 0.0
    %967 = vmatpush1.msra.mxu0 %v258
    %968 = vmatprep.subr.mxu0 0.0
    %969 = vmatpush1.msra.mxu0 0.0
    %970 = vmatprep.subr.mxu0 0.0
    %971 = vmatpush1.msra.mxu0 0.0
    %972 = vmatprep.subr.mxu0 0.0
    %973 = vmatpush1.msra.mxu0 0.0
    %974 = vmatprep.subr.mxu0 0.0
    %975 = vmatpush1.msra.mxu0 0.0
    %976 = vmatprep.subr.mxu0 0.0
    %977 = vmatpush1.msra.mxu0 0.0
    %978 = vmatprep.subr.mxu0 0.0
    %979 = vmatpush1.msra.mxu0 0.0
    %980 = vmatprep.subr.mxu0 0.0
    %981 = vmatpush1.msra.mxu0 0.0
    %982 = vmatprep.subr.mxu0 0.0
    %983 = vmatpush1.msra.mxu0 0.0
    %984 = vmatprep.subr.mxu0 0.0
    %985 = vmatpush1.msra.mxu0 0.0
    %986 = vmatprep.subr.mxu0 0.0
    %987 = vmatpush1.msra.mxu0 0.0
    %988 = vmatprep.subr.mxu0 0.0
    %989 = vmatpush1.msra.mxu0 0.0
    %990 = vmatprep.subr.mxu0 0.0
    %991 = vmatpush1.msra.mxu0 0.0
    %992 = vmatprep.subr.mxu0 0.0
    %993 = vmatpush1.msra.mxu0 0.0
    %994 = vmatprep.subr.mxu0 0.0
    %995 = vmatpush1.msra.mxu0 0.0
    %996 = vmatprep.subr.mxu0 0.0
    %997 = vmatpush1.msra.mxu0 0.0
    %998 = vmatprep.subr.mxu0 0.0
    %999 = vmatpush1.msra.mxu0 0.0
    %1000 = vmatprep.mubr.f32.mxu0 0.0
    %1001 = vmatmul.mubr.f32.gmra.mrb[0].mxu0 %v933
    %v1002 = vpop.f32.mrb[0].mxu0
    %v1003 = vadd.f32 %v237, %v1002
    %v1004 = vpop.f32.mrb[0].mxu0
    %1005 = vdwg.mxu0
    %1006 = vmatprep.subr.mxu0 0.0
    %1007 = vmatpush1.msra.mxu0 %v329
    %1008 = vmatprep.subr.mxu0 0.0
    %1009 = vmatpush1.msra.mxu0 %v330
    %1010 = vmatprep.subr.mxu0 0.0
    %1011 = vmatpush1.msra.mxu0 %v331
    %1012 = vmatprep.subr.mxu0 0.0
    %1013 = vmatpush1.msra.mxu0 %v332
    %1014 = vmatprep.subr.mxu0 0.0
    %1015 = vmatpush1.msra.mxu0 %v333
    %1016 = vmatprep.subr.mxu0 0.0
    %1017 = vmatpush1.msra.mxu0 %v334
    %1018 = vmatprep.subr.mxu0 0.0
    %1019 = vmatpush1.msra.mxu0 %v335
    %1020 = vmatprep.subr.mxu0 0.0
    %1021 = vmatpush1.msra.mxu0 %v336
    %1022 = vmatprep.subr.mxu0 0.0
    %1023 = vmatpush1.msra.mxu0 %v337
    %1024 = vmatprep.subr.mxu0 0.0
    %1025 = vmatpush1.msra.mxu0 %v338
    %1026 = vmatprep.subr.mxu0 0.0
    %1027 = vmatpush1.msra.mxu0 %v339
    %1028 = vmatprep.subr.mxu0 0.0
    %1029 = vmatpush1.msra.mxu0 %v340
    %1030 = vmatprep.subr.mxu0 0.0
    %1031 = vmatpush1.msra.mxu0 %v341
    %1032 = vmatprep.subr.mxu0 0.0
    %1033 = vmatpush1.msra.mxu0 %v342
    %1034 = vmatprep.subr.mxu0 0.0
    %1035 = vmatpush1.msra.mxu0 %v343
    %1036 = vmatprep.subr.mxu0 0.0
    %1037 = vmatpush1.msra.mxu0 %v344
    %1038 = vmatprep.subr.mxu0 0.0
    %1039 = vmatpush1.msra.mxu0 0.0
    %1040 = vmatprep.subr.mxu0 0.0
    %1041 = vmatpush1.msra.mxu0 0.0
    %1042 = vmatprep.subr.mxu0 0.0
    %1043 = vmatpush1.msra.mxu0 0.0
    %1044 = vmatprep.subr.mxu0 0.0
    %1045 = vmatpush1.msra.mxu0 0.0
    %1046 = vmatprep.subr.mxu0 0.0
    %1047 = vmatpush1.msra.mxu0 0.0
    %1048 = vmatprep.subr.mxu0 0.0
    %1049 = vmatpush1.msra.mxu0 0.0
    %1050 = vmatprep.subr.mxu0 0.0
    %1051 = vmatpush1.msra.mxu0 0.0
    %1052 = vmatprep.subr.mxu0 0.0
    %1053 = vmatpush1.msra.mxu0 0.0
    %1054 = vmatprep.subr.mxu0 0.0
    %1055 = vmatpush1.msra.mxu0 0.0
    %1056 = vmatprep.subr.mxu0 0.0
    %1057 = vmatpush1.msra.mxu0 0.0
    %1058 = vmatprep.subr.mxu0 0.0
    %1059 = vmatpush1.msra.mxu0 0.0
    %1060 = vmatprep.subr.mxu0 0.0
    %1061 = vmatpush1.msra.mxu0 0.0
    %1062 = vmatprep.subr.mxu0 0.0
    %1063 = vmatpush1.msra.mxu0 0.0
    %1064 = vmatprep.subr.mxu0 0.0
    %1065 = vmatpush1.msra.mxu0 0.0
    %1066 = vmatprep.subr.mxu0 0.0
    %1067 = vmatpush1.msra.mxu0 0.0
    %1068 = vmatprep.subr.mxu0 0.0
    %1069 = vmatpush1.msra.mxu0 0.0
    %1070 = vmatprep.mubr.f32.mxu0 0.0
    %1071 = vmatmul.mubr.f32.gmra.mrb[0].mxu0 %v862
    %v1072 = vpop.f32.mrb[0].mxu0
    %v1073 = vadd.f32 0.0, %v1072
    %v1074 = vpop.f32.mrb[0].mxu0
    %1075 = vdwg.mxu0
    %v1076 = vadd.f32 %v935, %v1073
    %v1077 = vtanh.pop %v1076
    %1078 = vmatprep.subr.mxu0 0.0
    %1079 = vmatpush1.msra.mxu0 %v417
    %1080 = vmatprep.subr.mxu0 0.0
    %1081 = vmatpush1.msra.mxu0 %v418
    %1082 = vmatprep.subr.mxu0 0.0
    %1083 = vmatpush1.msra.mxu0 %v419
    %1084 = vmatprep.subr.mxu0 0.0
    %1085 = vmatpush1.msra.mxu0 %v420
    %1086 = vmatprep.subr.mxu0 0.0
    %1087 = vmatpush1.msra.mxu0 %v421
    %1088 = vmatprep.subr.mxu0 0.0
    %1089 = vmatpush1.msra.mxu0 %v422
    %1090 = vmatprep.subr.mxu0 0.0
    %1091 = vmatpush1.msra.mxu0 %v423
    %1092 = vmatprep.subr.mxu0 0.0
    %1093 = vmatpush1.msra.mxu0 %v424
    %1094 = vmatprep.subr.mxu0 0.0
    %1095 = vmatpush1.msra.mxu0 %v425
    %1096 = vmatprep.subr.mxu0 0.0
    %1097 = vmatpush1.msra.mxu0 %v426
    %1098 = vmatprep.subr.mxu0 0.0
    %1099 = vmatpush1.msra.mxu0 %v427
    %1100 = vmatprep.subr.mxu0 0.0
    %1101 = vmatpush1.msra.mxu0 %v428
    %1102 = vmatprep.subr.mxu0 0.0
    %1103 = vmatpush1.msra.mxu0 %v429
    %1104 = vmatprep.subr.mxu0 0.0
    %1105 = vmatpush1.msra.mxu0 %v430
    %1106 = vmatprep.subr.mxu0 0.0
    %1107 = vmatpush1.msra.mxu0 %v431
    %1108 = vmatprep.subr.mxu0 0.0
    %1109 = vmatpush1.msra.mxu0 %v432
    %1110 = vmatprep.subr.mxu0 0.0
    %1111 = vmatpush1.msra.mxu0 0.0
    %1112 = vmatprep.subr.mxu0 0.0
    %1113 = vmatpush1.msra.mxu0 0.0
    %1114 = vmatprep.subr.mxu0 0.0
    %1115 = vmatpush1.msra.mxu0 0.0
    %1116 = vmatprep.subr.mxu0 0.0
    %1117 = vmatpush1.msra.mxu0 0.0
    %1118 = vmatprep.subr.mxu0 0.0
    %1119 = vmatpush1.msra.mxu0 0.0
    %1120 = vmatprep.subr.mxu0 0.0
    %1121 = vmatpush1.msra.mxu0 0.0
    %1122 = vmatprep.subr.mxu0 0.0
    %1123 = vmatpush1.msra.mxu0 0.0
    %1124 = vmatprep.subr.mxu0 0.0
    %1125 = vmatpush1.msra.mxu0 0.0
    %1126 = vmatprep.subr.mxu0 0.0
    %1127 = vmatpush1.msra.mxu0 0.0
    %1128 = vmatprep.subr.mxu0 0.0
    %1129 = vmatpush1.msra.mxu0 0.0
    %1130 = vmatprep.subr.mxu0 0.0
    %1131 = vmatpush1.msra.mxu0 0.0
    %1132 = vmatprep.subr.mxu0 0.0
    %1133 = vmatpush1.msra.mxu0 0.0
    %1134 = vmatprep.subr.mxu0 0.0
    %1135 = vmatpush1.msra.mxu0 0.0
    %1136 = vmatprep.subr.mxu0 0.0
    %1137 = vmatpush1.msra.mxu0 0.0
    %1138 = vmatprep.subr.mxu0 0.0
    %1139 = vmatpush1.msra.mxu0 0.0
    %1140 = vmatprep.subr.mxu0 0.0
    %1141 = vmatpush1.msra.mxu0 0.0
    %1142 = vmatprep.mubr.f32.mxu0 0.0
    %1143 = vmatmul.mubr.f32.gmra.mrb[0].mxu0 %v1077
    %v1144 = vpop.f32.mrb[0].mxu0
    %v1145 = vadd.f32 %v1003, %v1144
    %v1146 = vpop.f32.mrb[0].mxu0
    %1147 = vdwg.mxu0
    %v1148 = vtanh.pop %v1145
    %s1149 = scalar_lea.vmem [#allocation2], 32
    %v1150 = vld [vmem:[%s1149] sm:$0xff]
    %1151 = vmatprep.subr.mxu0 0.0
    %1152 = vmatpush1.msra.mxu0 %v243
    %1153 = vmatprep.subr.mxu0 0.0
    %1154 = vmatpush1.msra.mxu0 %v244
    %1155 = vmatprep.subr.mxu0 0.0
    %1156 = vmatpush1.msra.mxu0 %v245
    %1157 = vmatprep.subr.mxu0 0.0
    %1158 = vmatpush1.msra.mxu0 %v246
    %1159 = vmatprep.subr.mxu0 0.0
    %1160 = vmatpush1.msra.mxu0 %v247
    %1161 = vmatprep.subr.mxu0 0.0
    %1162 = vmatpush1.msra.mxu0 %v248
    %1163 = vmatprep.subr.mxu0 0.0
    %1164 = vmatpush1.msra.mxu0 %v249
    %1165 = vmatprep.subr.mxu0 0.0
    %1166 = vmatpush1.msra.mxu0 %v250
    %1167 = vmatprep.subr.mxu0 0.0
    %1168 = vmatpush1.msra.mxu0 %v251
    %1169 = vmatprep.subr.mxu0 0.0
    %1170 = vmatpush1.msra.mxu0 %v252
    %1171 = vmatprep.subr.mxu0 0.0
    %1172 = vmatpush1.msra.mxu0 %v253
    %1173 = vmatprep.subr.mxu0 0.0
    %1174 = vmatpush1.msra.mxu0 %v254
    %1175 = vmatprep.subr.mxu0 0.0
    %1176 = vmatpush1.msra.mxu0 %v255
    %1177 = vmatprep.subr.mxu0 0.0
    %1178 = vmatpush1.msra.mxu0 %v256
    %1179 = vmatprep.subr.mxu0 0.0
    %1180 = vmatpush1.msra.mxu0 %v257
    %1181 = vmatprep.subr.mxu0 0.0
    %1182 = vmatpush1.msra.mxu0 %v258
    %1183 = vmatprep.subr.mxu0 0.0
    %1184 = vmatpush1.msra.mxu0 0.0
    %1185 = vmatprep.subr.mxu0 0.0
    %1186 = vmatpush1.msra.mxu0 0.0
    %1187 = vmatprep.subr.mxu0 0.0
    %1188 = vmatpush1.msra.mxu0 0.0
    %1189 = vmatprep.subr.mxu0 0.0
    %1190 = vmatpush1.msra.mxu0 0.0
    %1191 = vmatprep.subr.mxu0 0.0
    %1192 = vmatpush1.msra.mxu0 0.0
    %1193 = vmatprep.subr.mxu0 0.0
    %1194 = vmatpush1.msra.mxu0 0.0
    %1195 = vmatprep.subr.mxu0 0.0
    %1196 = vmatpush1.msra.mxu0 0.0
    %1197 = vmatprep.subr.mxu0 0.0
    %1198 = vmatpush1.msra.mxu0 0.0
    %1199 = vmatprep.subr.mxu0 0.0
    %1200 = vmatpush1.msra.mxu0 0.0
    %1201 = vmatprep.subr.mxu0 0.0
    %1202 = vmatpush1.msra.mxu0 0.0
    %1203 = vmatprep.subr.mxu0 0.0
    %1204 = vmatpush1.msra.mxu0 0.0
    %1205 = vmatprep.subr.mxu0 0.0
    %1206 = vmatpush1.msra.mxu0 0.0
    %1207 = vmatprep.subr.mxu0 0.0
    %1208 = vmatpush1.msra.mxu0 0.0
    %1209 = vmatprep.subr.mxu0 0.0
    %1210 = vmatpush1.msra.mxu0 0.0
    %1211 = vmatprep.subr.mxu0 0.0
    %1212 = vmatpush1.msra.mxu0 0.0
    %1213 = vmatprep.subr.mxu0 0.0
    %1214 = vmatpush1.msra.mxu0 0.0
    %1215 = vmatprep.mubr.f32.mxu0 0.0
    %1216 = vmatmul.mubr.f32.gmra.mrb[0].mxu0 %v1148
    %v1217 = vpop.f32.mrb[0].mxu0
    %v1218 = vadd.f32 %v237, %v1217
    %v1219 = vpop.f32.mrb[0].mxu0
    %1220 = vdwg.mxu0
    %1221 = vmatprep.subr.mxu0 0.0
    %1222 = vmatpush1.msra.mxu0 %v329
    %1223 = vmatprep.subr.mxu0 0.0
    %1224 = vmatpush1.msra.mxu0 %v330
    %1225 = vmatprep.subr.mxu0 0.0
    %1226 = vmatpush1.msra.mxu0 %v331
    %1227 = vmatprep.subr.mxu0 0.0
    %1228 = vmatpush1.msra.mxu0 %v332
    %1229 = vmatprep.subr.mxu0 0.0
    %1230 = vmatpush1.msra.mxu0 %v333
    %1231 = vmatprep.subr.mxu0 0.0
    %1232 = vmatpush1.msra.mxu0 %v334
    %1233 = vmatprep.subr.mxu0 0.0
    %1234 = vmatpush1.msra.mxu0 %v335
    %1235 = vmatprep.subr.mxu0 0.0
    %1236 = vmatpush1.msra.mxu0 %v336
    %1237 = vmatprep.subr.mxu0 0.0
    %1238 = vmatpush1.msra.mxu0 %v337
    %1239 = vmatprep.subr.mxu0 0.0
    %1240 = vmatpush1.msra.mxu0 %v338
    %1241 = vmatprep.subr.mxu0 0.0
    %1242 = vmatpush1.msra.mxu0 %v339
    %1243 = vmatprep.subr.mxu0 0.0
    %1244 = vmatpush1.msra.mxu0 %v340
    %1245 = vmatprep.subr.mxu0 0.0
    %1246 = vmatpush1.msra.mxu0 %v341
    %1247 = vmatprep.subr.mxu0 0.0
    %1248 = vmatpush1.msra.mxu0 %v342
    %1249 = vmatprep.subr.mxu0 0.0
    %1250 = vmatpush1.msra.mxu0 %v343
    %1251 = vmatprep.subr.mxu0 0.0
    %1252 = vmatpush1.msra.mxu0 %v344
    %1253 = vmatprep.subr.mxu0 0.0
    %1254 = vmatpush1.msra.mxu0 0.0
    %1255 = vmatprep.subr.mxu0 0.0
    %1256 = vmatpush1.msra.mxu0 0.0
    %1257 = vmatprep.subr.mxu0 0.0
    %1258 = vmatpush1.msra.mxu0 0.0
    %1259 = vmatprep.subr.mxu0 0.0
    %1260 = vmatpush1.msra.mxu0 0.0
    %1261 = vmatprep.subr.mxu0 0.0
    %1262 = vmatpush1.msra.mxu0 0.0
    %1263 = vmatprep.subr.mxu0 0.0
    %1264 = vmatpush1.msra.mxu0 0.0
    %1265 = vmatprep.subr.mxu0 0.0
    %1266 = vmatpush1.msra.mxu0 0.0
    %1267 = vmatprep.subr.mxu0 0.0
    %1268 = vmatpush1.msra.mxu0 0.0
    %1269 = vmatprep.subr.mxu0 0.0
    %1270 = vmatpush1.msra.mxu0 0.0
    %1271 = vmatprep.subr.mxu0 0.0
    %1272 = vmatpush1.msra.mxu0 0.0
    %1273 = vmatprep.subr.mxu0 0.0
    %1274 = vmatpush1.msra.mxu0 0.0
    %1275 = vmatprep.subr.mxu0 0.0
    %1276 = vmatpush1.msra.mxu0 0.0
    %1277 = vmatprep.subr.mxu0 0.0
    %1278 = vmatpush1.msra.mxu0 0.0
    %1279 = vmatprep.subr.mxu0 0.0
    %1280 = vmatpush1.msra.mxu0 0.0
    %1281 = vmatprep.subr.mxu0 0.0
    %1282 = vmatpush1.msra.mxu0 0.0
    %1283 = vmatprep.subr.mxu0 0.0
    %1284 = vmatpush1.msra.mxu0 0.0
    %1285 = vmatprep.mubr.f32.mxu0 0.0
    %1286 = vmatmul.mubr.f32.gmra.mrb[0].mxu0 %v1077
    %v1287 = vpop.f32.mrb[0].mxu0
    %v1288 = vadd.f32 0.0, %v1287
    %v1289 = vpop.f32.mrb[0].mxu0
    %1290 = vdwg.mxu0
    %v1291 = vadd.f32 %v1150, %v1288
    %v1292 = vtanh.pop %v1291
    %1293 = vmatprep.subr.mxu0 0.0
    %1294 = vmatpush1.msra.mxu0 %v417
    %1295 = vmatprep.subr.mxu0 0.0
    %1296 = vmatpush1.msra.mxu0 %v418
    %1297 = vmatprep.subr.mxu0 0.0
    %1298 = vmatpush1.msra.mxu0 %v419
    %1299 = vmatprep.subr.mxu0 0.0
    %1300 = vmatpush1.msra.mxu0 %v420
    %1301 = vmatprep.subr.mxu0 0.0
    %1302 = vmatpush1.msra.mxu0 %v421
    %1303 = vmatprep.subr.mxu0 0.0
    %1304 = vmatpush1.msra.mxu0 %v422
    %1305 = vmatprep.subr.mxu0 0.0
    %1306 = vmatpush1.msra.mxu0 %v423
    %1307 = vmatprep.subr.mxu0 0.0
    %1308 = vmatpush1.msra.mxu0 %v424
    %1309 = vmatprep.subr.mxu0 0.0
    %1310 = vmatpush1.msra.mxu0 %v425
    %1311 = vmatprep.subr.mxu0 0.0
    %1312 = vmatpush1.msra.mxu0 %v426
    %1313 = vmatprep.subr.mxu0 0.0
    %1314 = vmatpush1.msra.mxu0 %v427
    %1315 = vmatprep.subr.mxu0 0.0
    %1316 = vmatpush1.msra.mxu0 %v428
    %1317 = vmatprep.subr.mxu0 0.0
    %1318 = vmatpush1.msra.mxu0 %v429
    %1319 = vmatprep.subr.mxu0 0.0
    %1320 = vmatpush1.msra.mxu0 %v430
    %1321 = vmatprep.subr.mxu0 0.0
    %1322 = vmatpush1.msra.mxu0 %v431
    %1323 = vmatprep.subr.mxu0 0.0
    %1324 = vmatpush1.msra.mxu0 %v432
    %1325 = vmatprep.subr.mxu0 0.0
    %1326 = vmatpush1.msra.mxu0 0.0
    %1327 = vmatprep.subr.mxu0 0.0
    %1328 = vmatpush1.msra.mxu0 0.0
    %1329 = vmatprep.subr.mxu0 0.0
    %1330 = vmatpush1.msra.mxu0 0.0
    %1331 = vmatprep.subr.mxu0 0.0
    %1332 = vmatpush1.msra.mxu0 0.0
    %1333 = vmatprep.subr.mxu0 0.0
    %1334 = vmatpush1.msra.mxu0 0.0
    %1335 = vmatprep.subr.mxu0 0.0
    %1336 = vmatpush1.msra.mxu0 0.0
    %1337 = vmatprep.subr.mxu0 0.0
    %1338 = vmatpush1.msra.mxu0 0.0
    %1339 = vmatprep.subr.mxu0 0.0
    %1340 = vmatpush1.msra.mxu0 0.0
    %1341 = vmatprep.subr.mxu0 0.0
    %1342 = vmatpush1.msra.mxu0 0.0
    %1343 = vmatprep.subr.mxu0 0.0
    %1344 = vmatpush1.msra.mxu0 0.0
    %1345 = vmatprep.subr.mxu0 0.0
    %1346 = vmatpush1.msra.mxu0 0.0
    %1347 = vmatprep.subr.mxu0 0.0
    %1348 = vmatpush1.msra.mxu0 0.0
    %1349 = vmatprep.subr.mxu0 0.0
    %1350 = vmatpush1.msra.mxu0 0.0
    %1351 = vmatprep.subr.mxu0 0.0
    %1352 = vmatpush1.msra.mxu0 0.0
    %1353 = vmatprep.subr.mxu0 0.0
    %1354 = vmatpush1.msra.mxu0 0.0
    %1355 = vmatprep.subr.mxu0 0.0
    %1356 = vmatpush1.msra.mxu0 0.0
    %1357 = vmatprep.mubr.f32.mxu0 0.0
    %1358 = vmatmul.mubr.f32.gmra.mrb[0].mxu0 %v1292
    %v1359 = vpop.f32.mrb[0].mxu0
    %v1360 = vadd.f32 %v1218, %v1359
    %v1361 = vpop.f32.mrb[0].mxu0
    %1362 = vdwg.mxu0
    %v1363 = vtanh.pop %v1360
    %s1364 = scalar_lea.vmem [#allocation2], 40
    %v1365 = vld [vmem:[%s1364] sm:$0xff]
    %1366 = vmatprep.subr.mxu0 0.0
    %1367 = vmatpush1.msra.mxu0 %v243
    %1368 = vmatprep.subr.mxu0 0.0
    %1369 = vmatpush1.msra.mxu0 %v244
    %1370 = vmatprep.subr.mxu0 0.0
    %1371 = vmatpush1.msra.mxu0 %v245
    %1372 = vmatprep.subr.mxu0 0.0
    %1373 = vmatpush1.msra.mxu0 %v246
    %1374 = vmatprep.subr.mxu0 0.0
    %1375 = vmatpush1.msra.mxu0 %v247
    %1376 = vmatprep.subr.mxu0 0.0
    %1377 = vmatpush1.msra.mxu0 %v248
    %1378 = vmatprep.subr.mxu0 0.0
    %1379 = vmatpush1.msra.mxu0 %v249
    %1380 = vmatprep.subr.mxu0 0.0
    %1381 = vmatpush1.msra.mxu0 %v250
    %1382 = vmatprep.subr.mxu0 0.0
    %1383 = vmatpush1.msra.mxu0 %v251
    %1384 = vmatprep.subr.mxu0 0.0
    %1385 = vmatpush1.msra.mxu0 %v252
    %1386 = vmatprep.subr.mxu0 0.0
    %1387 = vmatpush1.msra.mxu0 %v253
    %1388 = vmatprep.subr.mxu0 0.0
    %1389 = vmatpush1.msra.mxu0 %v254
    %1390 = vmatprep.subr.mxu0 0.0
    %1391 = vmatpush1.msra.mxu0 %v255
    %1392 = vmatprep.subr.mxu0 0.0
    %1393 = vmatpush1.msra.mxu0 %v256
    %1394 = vmatprep.subr.mxu0 0.0
    %1395 = vmatpush1.msra.mxu0 %v257
    %1396 = vmatprep.subr.mxu0 0.0
    %1397 = vmatpush1.msra.mxu0 %v258
    %1398 = vmatprep.subr.mxu0 0.0
    %1399 = vmatpush1.msra.mxu0 0.0
    %1400 = vmatprep.subr.mxu0 0.0
    %1401 = vmatpush1.msra.mxu0 0.0
    %1402 = vmatprep.subr.mxu0 0.0
    %1403 = vmatpush1.msra.mxu0 0.0
    %1404 = vmatprep.subr.mxu0 0.0
    %1405 = vmatpush1.msra.mxu0 0.0
    %1406 = vmatprep.subr.mxu0 0.0
    %1407 = vmatpush1.msra.mxu0 0.0
    %1408 = vmatprep.subr.mxu0 0.0
    %1409 = vmatpush1.msra.mxu0 0.0
    %1410 = vmatprep.subr.mxu0 0.0
    %1411 = vmatpush1.msra.mxu0 0.0
    %1412 = vmatprep.subr.mxu0 0.0
    %1413 = vmatpush1.msra.mxu0 0.0
    %1414 = vmatprep.subr.mxu0 0.0
    %1415 = vmatpush1.msra.mxu0 0.0
    %1416 = vmatprep.subr.mxu0 0.0
    %1417 = vmatpush1.msra.mxu0 0.0
    %1418 = vmatprep.subr.mxu0 0.0
    %1419 = vmatpush1.msra.mxu0 0.0
    %1420 = vmatprep.subr.mxu0 0.0
    %1421 = vmatpush1.msra.mxu0 0.0
    %1422 = vmatprep.subr.mxu0 0.0
    %1423 = vmatpush1.msra.mxu0 0.0
    %1424 = vmatprep.subr.mxu0 0.0
    %1425 = vmatpush1.msra.mxu0 0.0
    %1426 = vmatprep.subr.mxu0 0.0
    %1427 = vmatpush1.msra.mxu0 0.0
    %1428 = vmatprep.subr.mxu0 0.0
    %1429 = vmatpush1.msra.mxu0 0.0
    %1430 = vmatprep.mubr.f32.mxu0 0.0
    %1431 = vmatmul.mubr.f32.gmra.mrb[0].mxu0 %v1363
    %v1432 = vpop.f32.mrb[0].mxu0
    %v1433 = vadd.f32 %v237, %v1432
    %v1434 = vpop.f32.mrb[0].mxu0
    %1435 = vdwg.mxu0
    %1436 = vmatprep.subr.mxu0 0.0
    %1437 = vmatpush1.msra.mxu0 %v329
    %1438 = vmatprep.subr.mxu0 0.0
    %1439 = vmatpush1.msra.mxu0 %v330
    %1440 = vmatprep.subr.mxu0 0.0
    %1441 = vmatpush1.msra.mxu0 %v331
    %1442 = vmatprep.subr.mxu0 0.0
    %1443 = vmatpush1.msra.mxu0 %v332
    %1444 = vmatprep.subr.mxu0 0.0
    %1445 = vmatpush1.msra.mxu0 %v333
    %1446 = vmatprep.subr.mxu0 0.0
    %1447 = vmatpush1.msra.mxu0 %v334
    %1448 = vmatprep.subr.mxu0 0.0
    %1449 = vmatpush1.msra.mxu0 %v335
    %1450 = vmatprep.subr.mxu0 0.0
    %1451 = vmatpush1.msra.mxu0 %v336
    %1452 = vmatprep.subr.mxu0 0.0
    %1453 = vmatpush1.msra.mxu0 %v337
    %1454 = vmatprep.subr.mxu0 0.0
    %1455 = vmatpush1.msra.mxu0 %v338
    %1456 = vmatprep.subr.mxu0 0.0
    %1457 = vmatpush1.msra.mxu0 %v339
    %1458 = vmatprep.subr.mxu0 0.0
    %1459 = vmatpush1.msra.mxu0 %v340
    %1460 = vmatprep.subr.mxu0 0.0
    %1461 = vmatpush1.msra.mxu0 %v341
    %1462 = vmatprep.subr.mxu0 0.0
    %1463 = vmatpush1.msra.mxu0 %v342
    %1464 = vmatprep.subr.mxu0 0.0
    %1465 = vmatpush1.msra.mxu0 %v343
    %1466 = vmatprep.subr.mxu0 0.0
    %1467 = vmatpush1.msra.mxu0 %v344
    %1468 = vmatprep.subr.mxu0 0.0
    %1469 = vmatpush1.msra.mxu0 0.0
    %1470 = vmatprep.subr.mxu0 0.0
    %1471 = vmatpush1.msra.mxu0 0.0
    %1472 = vmatprep.subr.mxu0 0.0
    %1473 = vmatpush1.msra.mxu0 0.0
    %1474 = vmatprep.subr.mxu0 0.0
    %1475 = vmatpush1.msra.mxu0 0.0
    %1476 = vmatprep.subr.mxu0 0.0
    %1477 = vmatpush1.msra.mxu0 0.0
    %1478 = vmatprep.subr.mxu0 0.0
    %1479 = vmatpush1.msra.mxu0 0.0
    %1480 = vmatprep.subr.mxu0 0.0
    %1481 = vmatpush1.msra.mxu0 0.0
    %1482 = vmatprep.subr.mxu0 0.0
    %1483 = vmatpush1.msra.mxu0 0.0
    %1484 = vmatprep.subr.mxu0 0.0
    %1485 = vmatpush1.msra.mxu0 0.0
    %1486 = vmatprep.subr.mxu0 0.0
    %1487 = vmatpush1.msra.mxu0 0.0
    %1488 = vmatprep.subr.mxu0 0.0
    %1489 = vmatpush1.msra.mxu0 0.0
    %1490 = vmatprep.subr.mxu0 0.0
    %1491 = vmatpush1.msra.mxu0 0.0
    %1492 = vmatprep.subr.mxu0 0.0
    %1493 = vmatpush1.msra.mxu0 0.0
    %1494 = vmatprep.subr.mxu0 0.0
    %1495 = vmatpush1.msra.mxu0 0.0
    %1496 = vmatprep.subr.mxu0 0.0
    %1497 = vmatpush1.msra.mxu0 0.0
    %1498 = vmatprep.subr.mxu0 0.0
    %1499 = vmatpush1.msra.mxu0 0.0
    %1500 = vmatprep.mubr.f32.mxu0 0.0
    %1501 = vmatmul.mubr.f32.gmra.mrb[0].mxu0 %v1292
    %v1502 = vpop.f32.mrb[0].mxu0
    %v1503 = vadd.f32 0.0, %v1502
    %v1504 = vpop.f32.mrb[0].mxu0
    %1505 = vdwg.mxu0
    %v1506 = vadd.f32 %v1365, %v1503
    %v1507 = vtanh.pop %v1506
    %1508 = vmatprep.subr.mxu0 0.0
    %1509 = vmatpush1.msra.mxu0 %v417
    %1510 = vmatprep.subr.mxu0 0.0
    %1511 = vmatpush1.msra.mxu0 %v418
    %1512 = vmatprep.subr.mxu0 0.0
    %1513 = vmatpush1.msra.mxu0 %v419
    %1514 = vmatprep.subr.mxu0 0.0
    %1515 = vmatpush1.msra.mxu0 %v420
    %1516 = vmatprep.subr.mxu0 0.0
    %1517 = vmatpush1.msra.mxu0 %v421
    %1518 = vmatprep.subr.mxu0 0.0
    %1519 = vmatpush1.msra.mxu0 %v422
    %1520 = vmatprep.subr.mxu0 0.0
    %1521 = vmatpush1.msra.mxu0 %v423
    %1522 = vmatprep.subr.mxu0 0.0
    %1523 = vmatpush1.msra.mxu0 %v424
    %1524 = vmatprep.subr.mxu0 0.0
    %1525 = vmatpush1.msra.mxu0 %v425
    %1526 = vmatprep.subr.mxu0 0.0
    %1527 = vmatpush1.msra.mxu0 %v426
    %1528 = vmatprep.subr.mxu0 0.0
    %1529 = vmatpush1.msra.mxu0 %v427
    %1530 = vmatprep.subr.mxu0 0.0
    %1531 = vmatpush1.msra.mxu0 %v428
    %1532 = vmatprep.subr.mxu0 0.0
    %1533 = vmatpush1.msra.mxu0 %v429
    %1534 = vmatprep.subr.mxu0 0.0
    %1535 = vmatpush1.msra.mxu0 %v430
    %1536 = vmatprep.subr.mxu0 0.0
    %1537 = vmatpush1.msra.mxu0 %v431
    %1538 = vmatprep.subr.mxu0 0.0
    %1539 = vmatpush1.msra.mxu0 %v432
    %1540 = vmatprep.subr.mxu0 0.0
    %1541 = vmatpush1.msra.mxu0 0.0
    %1542 = vmatprep.subr.mxu0 0.0
    %1543 = vmatpush1.msra.mxu0 0.0
    %1544 = vmatprep.subr.mxu0 0.0
    %1545 = vmatpush1.msra.mxu0 0.0
    %1546 = vmatprep.subr.mxu0 0.0
    %1547 = vmatpush1.msra.mxu0 0.0
    %1548 = vmatprep.subr.mxu0 0.0
    %1549 = vmatpush1.msra.mxu0 0.0
    %1550 = vmatprep.subr.mxu0 0.0
    %1551 = vmatpush1.msra.mxu0 0.0
    %1552 = vmatprep.subr.mxu0 0.0
    %1553 = vmatpush1.msra.mxu0 0.0
    %1554 = vmatprep.subr.mxu0 0.0
    %1555 = vmatpush1.msra.mxu0 0.0
    %1556 = vmatprep.subr.mxu0 0.0
    %1557 = vmatpush1.msra.mxu0 0.0
    %1558 = vmatprep.subr.mxu0 0.0
    %1559 = vmatpush1.msra.mxu0 0.0
    %1560 = vmatprep.subr.mxu0 0.0
    %1561 = vmatpush1.msra.mxu0 0.0
    %1562 = vmatprep.subr.mxu0 0.0
    %1563 = vmatpush1.msra.mxu0 0.0
    %1564 = vmatprep.subr.mxu0 0.0
    %1565 = vmatpush1.msra.mxu0 0.0
    %1566 = vmatprep.subr.mxu0 0.0
    %1567 = vmatpush1.msra.mxu0 0.0
    %1568 = vmatprep.subr.mxu0 0.0
    %1569 = vmatpush1.msra.mxu0 0.0
    %1570 = vmatprep.subr.mxu0 0.0
    %1571 = vmatpush1.msra.mxu0 0.0
    %1572 = vmatprep.mubr.f32.mxu0 0.0
    %1573 = vmatmul.mubr.f32.gmra.mrb[0].mxu0 %v1507
    %v1574 = vpop.f32.mrb[0].mxu0
    %v1575 = vadd.f32 %v1433, %v1574
    %v1576 = vpop.f32.mrb[0].mxu0
    %1577 = vdwg.mxu0
    %v1578 = vtanh.pop %v1575
    %s1579 = scalar_lea.vmem [#allocation2], 48
    %v1580 = vld [vmem:[%s1579] sm:$0xff]
    %1581 = vmatprep.subr.mxu0 0.0
    %1582 = vmatpush1.msra.mxu0 %v243
    %1583 = vmatprep.subr.mxu0 0.0
    %1584 = vmatpush1.msra.mxu0 %v244
    %1585 = vmatprep.subr.mxu0 0.0
    %1586 = vmatpush1.msra.mxu0 %v245
    %1587 = vmatprep.subr.mxu0 0.0
    %1588 = vmatpush1.msra.mxu0 %v246
    %1589 = vmatprep.subr.mxu0 0.0
    %1590 = vmatpush1.msra.mxu0 %v247
    %1591 = vmatprep.subr.mxu0 0.0
    %1592 = vmatpush1.msra.mxu0 %v248
    %1593 = vmatprep.subr.mxu0 0.0
    %1594 = vmatpush1.msra.mxu0 %v249
    %1595 = vmatprep.subr.mxu0 0.0
    %1596 = vmatpush1.msra.mxu0 %v250
    %1597 = vmatprep.subr.mxu0 0.0
    %1598 = vmatpush1.msra.mxu0 %v251
    %1599 = vmatprep.subr.mxu0 0.0
    %1600 = vmatpush1.msra.mxu0 %v252
    %1601 = vmatprep.subr.mxu0 0.0
    %1602 = vmatpush1.msra.mxu0 %v253
    %1603 = vmatprep.subr.mxu0 0.0
    %1604 = vmatpush1.msra.mxu0 %v254
    %1605 = vmatprep.subr.mxu0 0.0
    %1606 = vmatpush1.msra.mxu0 %v255
    %1607 = vmatprep.subr.mxu0 0.0
    %1608 = vmatpush1.msra.mxu0 %v256
    %1609 = vmatprep.subr.mxu0 0.0
    %1610 = vmatpush1.msra.mxu0 %v257
    %1611 = vmatprep.subr.mxu0 0.0
    %1612 = vmatpush1.msra.mxu0 %v258
    %1613 = vmatprep.subr.mxu0 0.0
    %1614 = vmatpush1.msra.mxu0 0.0
    %1615 = vmatprep.subr.mxu0 0.0
    %1616 = vmatpush1.msra.mxu0 0.0
    %1617 = vmatprep.subr.mxu0 0.0
    %1618 = vmatpush1.msra.mxu0 0.0
    %1619 = vmatprep.subr.mxu0 0.0
    %1620 = vmatpush1.msra.mxu0 0.0
    %1621 = vmatprep.subr.mxu0 0.0
    %1622 = vmatpush1.msra.mxu0 0.0
    %1623 = vmatprep.subr.mxu0 0.0
    %1624 = vmatpush1.msra.mxu0 0.0
    %1625 = vmatprep.subr.mxu0 0.0
    %1626 = vmatpush1.msra.mxu0 0.0
    %1627 = vmatprep.subr.mxu0 0.0
    %1628 = vmatpush1.msra.mxu0 0.0
    %1629 = vmatprep.subr.mxu0 0.0
    %1630 = vmatpush1.msra.mxu0 0.0
    %1631 = vmatprep.subr.mxu0 0.0
    %1632 = vmatpush1.msra.mxu0 0.0
    %1633 = vmatprep.subr.mxu0 0.0
    %1634 = vmatpush1.msra.mxu0 0.0
    %1635 = vmatprep.subr.mxu0 0.0
    %1636 = vmatpush1.msra.mxu0 0.0
    %1637 = vmatprep.subr.mxu0 0.0
    %1638 = vmatpush1.msra.mxu0 0.0
    %1639 = vmatprep.subr.mxu0 0.0
    %1640 = vmatpush1.msra.mxu0 0.0
    %1641 = vmatprep.subr.mxu0 0.0
    %1642 = vmatpush1.msra.mxu0 0.0
    %1643 = vmatprep.subr.mxu0 0.0
    %1644 = vmatpush1.msra.mxu0 0.0
    %1645 = vmatprep.mubr.f32.mxu0 0.0
    %1646 = vmatmul.mubr.f32.gmra.mrb[0].mxu0 %v1578
    %v1647 = vpop.f32.mrb[0].mxu0
    %v1648 = vadd.f32 %v237, %v1647
    %v1649 = vpop.f32.mrb[0].mxu0
    %1650 = vdwg.mxu0
    %1651 = vmatprep.subr.mxu0 0.0
    %1652 = vmatpush1.msra.mxu0 %v329
    %1653 = vmatprep.subr.mxu0 0.0
    %1654 = vmatpush1.msra.mxu0 %v330
    %1655 = vmatprep.subr.mxu0 0.0
    %1656 = vmatpush1.msra.mxu0 %v331
    %1657 = vmatprep.subr.mxu0 0.0
    %1658 = vmatpush1.msra.mxu0 %v332
    %1659 = vmatprep.subr.mxu0 0.0
    %1660 = vmatpush1.msra.mxu0 %v333
    %1661 = vmatprep.subr.mxu0 0.0
    %1662 = vmatpush1.msra.mxu0 %v334
    %1663 = vmatprep.subr.mxu0 0.0
    %1664 = vmatpush1.msra.mxu0 %v335
    %1665 = vmatprep.subr.mxu0 0.0
    %1666 = vmatpush1.msra.mxu0 %v336
    %1667 = vmatprep.subr.mxu0 0.0
    %1668 = vmatpush1.msra.mxu0 %v337
    %1669 = vmatprep.subr.mxu0 0.0
    %1670 = vmatpush1.msra.mxu0 %v338
    %1671 = vmatprep.subr.mxu0 0.0
    %1672 = vmatpush1.msra.mxu0 %v339
    %1673 = vmatprep.subr.mxu0 0.0
    %1674 = vmatpush1.msra.mxu0 %v340
    %1675 = vmatprep.subr.mxu0 0.0
    %1676 = vmatpush1.msra.mxu0 %v341
    %1677 = vmatprep.subr.mxu0 0.0
    %1678 = vmatpush1.msra.mxu0 %v342
    %1679 = vmatprep.subr.mxu0 0.0
    %1680 = vmatpush1.msra.mxu0 %v343
    %1681 = vmatprep.subr.mxu0 0.0
    %1682 = vmatpush1.msra.mxu0 %v344
    %1683 = vmatprep.subr.mxu0 0.0
    %1684 = vmatpush1.msra.mxu0 0.0
    %1685 = vmatprep.subr.mxu0 0.0
    %1686 = vmatpush1.msra.mxu0 0.0
    %1687 = vmatprep.subr.mxu0 0.0
    %1688 = vmatpush1.msra.mxu0 0.0
    %1689 = vmatprep.subr.mxu0 0.0
    %1690 = vmatpush1.msra.mxu0 0.0
    %1691 = vmatprep.subr.mxu0 0.0
    %1692 = vmatpush1.msra.mxu0 0.0
    %1693 = vmatprep.subr.mxu0 0.0
    %1694 = vmatpush1.msra.mxu0 0.0
    %1695 = vmatprep.subr.mxu0 0.0
    %1696 = vmatpush1.msra.mxu0 0.0
    %1697 = vmatprep.subr.mxu0 0.0
    %1698 = vmatpush1.msra.mxu0 0.0
    %1699 = vmatprep.subr.mxu0 0.0
    %1700 = vmatpush1.msra.mxu0 0.0
    %1701 = vmatprep.subr.mxu0 0.0
    %1702 = vmatpush1.msra.mxu0 0.0
    %1703 = vmatprep.subr.mxu0 0.0
    %1704 = vmatpush1.msra.mxu0 0.0
    %1705 = vmatprep.subr.mxu0 0.0
    %1706 = vmatpush1.msra.mxu0 0.0
    %1707 = vmatprep.subr.mxu0 0.0
    %1708 = vmatpush1.msra.mxu0 0.0
    %1709 = vmatprep.subr.mxu0 0.0
    %1710 = vmatpush1.msra.mxu0 0.0
    %1711 = vmatprep.subr.mxu0 0.0
    %1712 = vmatpush1.msra.mxu0 0.0
    %1713 = vmatprep.subr.mxu0 0.0
    %1714 = vmatpush1.msra.mxu0 0.0
    %1715 = vmatprep.mubr.f32.mxu0 0.0
    %1716 = vmatmul.mubr.f32.gmra.mrb[0].mxu0 %v1507
    %v1717 = vpop.f32.mrb[0].mxu0
    %v1718 = vadd.f32 0.0, %v1717
    %v1719 = vpop.f32.mrb[0].mxu0
    %1720 = vdwg.mxu0
    %v1721 = vadd.f32 %v1580, %v1718
    %v1722 = vtanh.pop %v1721
    %1723 = vmatprep.subr.mxu0 0.0
    %1724 = vmatpush1.msra.mxu0 %v417
    %1725 = vmatprep.subr.mxu0 0.0
    %1726 = vmatpush1.msra.mxu0 %v418
    %1727 = vmatprep.subr.mxu0 0.0
    %1728 = vmatpush1.msra.mxu0 %v419
    %1729 = vmatprep.subr.mxu0 0.0
    %1730 = vmatpush1.msra.mxu0 %v420
    %1731 = vmatprep.subr.mxu0 0.0
    %1732 = vmatpush1.msra.mxu0 %v421
    %1733 = vmatprep.subr.mxu0 0.0
    %1734 = vmatpush1.msra.mxu0 %v422
    %1735 = vmatprep.subr.mxu0 0.0
    %1736 = vmatpush1.msra.mxu0 %v423
    %1737 = vmatprep.subr.mxu0 0.0
    %1738 = vmatpush1.msra.mxu0 %v424
    %1739 = vmatprep.subr.mxu0 0.0
    %1740 = vmatpush1.msra.mxu0 %v425
    %1741 = vmatprep.subr.mxu0 0.0
    %1742 = vmatpush1.msra.mxu0 %v426
    %1743 = vmatprep.subr.mxu0 0.0
    %1744 = vmatpush1.msra.mxu0 %v427
    %1745 = vmatprep.subr.mxu0 0.0
    %1746 = vmatpush1.msra.mxu0 %v428
    %1747 = vmatprep.subr.mxu0 0.0
    %1748 = vmatpush1.msra.mxu0 %v429
    %1749 = vmatprep.subr.mxu0 0.0
    %1750 = vmatpush1.msra.mxu0 %v430
    %1751 = vmatprep.subr.mxu0 0.0
    %1752 = vmatpush1.msra.mxu0 %v431
    %1753 = vmatprep.subr.mxu0 0.0
    %1754 = vmatpush1.msra.mxu0 %v432
    %1755 = vmatprep.subr.mxu0 0.0
    %1756 = vmatpush1.msra.mxu0 0.0
    %1757 = vmatprep.subr.mxu0 0.0
    %1758 = vmatpush1.msra.mxu0 0.0
    %1759 = vmatprep.subr.mxu0 0.0
    %1760 = vmatpush1.msra.mxu0 0.0
    %1761 = vmatprep.subr.mxu0 0.0
    %1762 = vmatpush1.msra.mxu0 0.0
    %1763 = vmatprep.subr.mxu0 0.0
    %1764 = vmatpush1.msra.mxu0 0.0
    %1765 = vmatprep.subr.mxu0 0.0
    %1766 = vmatpush1.msra.mxu0 0.0
    %1767 = vmatprep.subr.mxu0 0.0
    %1768 = vmatpush1.msra.mxu0 0.0
    %1769 = vmatprep.subr.mxu0 0.0
    %1770 = vmatpush1.msra.mxu0 0.0
    %1771 = vmatprep.subr.mxu0 0.0
    %1772 = vmatpush1.msra.mxu0 0.0
    %1773 = vmatprep.subr.mxu0 0.0
    %1774 = vmatpush1.msra.mxu0 0.0
    %1775 = vmatprep.subr.mxu0 0.0
    %1776 = vmatpush1.msra.mxu0 0.0
    %1777 = vmatprep.subr.mxu0 0.0
    %1778 = vmatpush1.msra.mxu0 0.0
    %1779 = vmatprep.subr.mxu0 0.0
    %1780 = vmatpush1.msra.mxu0 0.0
    %1781 = vmatprep.subr.mxu0 0.0
    %1782 = vmatpush1.msra.mxu0 0.0
    %1783 = vmatprep.subr.mxu0 0.0
    %1784 = vmatpush1.msra.mxu0 0.0
    %1785 = vmatprep.subr.mxu0 0.0
    %1786 = vmatpush1.msra.mxu0 0.0
    %1787 = vmatprep.mubr.f32.mxu0 0.0
    %1788 = vmatmul.mubr.f32.gmra.mrb[0].mxu0 %v1722
    %v1789 = vpop.f32.mrb[0].mxu0
    %v1790 = vadd.f32 %v1648, %v1789
    %v1791 = vpop.f32.mrb[0].mxu0
    %1792 = vdwg.mxu0
    %v1793 = vtanh.pop %v1790
    %s1794 = scalar_lea.vmem [#allocation2], 56
    %v1795 = vld [vmem:[%s1794] sm:$0xff]
    %1796 = vmatprep.subr.mxu0 0.0
    %1797 = vmatpush1.msra.mxu0 %v243
    %1798 = vmatprep.subr.mxu0 0.0
    %1799 = vmatpush1.msra.mxu0 %v244
    %1800 = vmatprep.subr.mxu0 0.0
    %1801 = vmatpush1.msra.mxu0 %v245
    %1802 = vmatprep.subr.mxu0 0.0
    %1803 = vmatpush1.msra.mxu0 %v246
    %1804 = vmatprep.subr.mxu0 0.0
    %1805 = vmatpush1.msra.mxu0 %v247
    %1806 = vmatprep.subr.mxu0 0.0
    %1807 = vmatpush1.msra.mxu0 %v248
    %1808 = vmatprep.subr.mxu0 0.0
    %1809 = vmatpush1.msra.mxu0 %v249
    %1810 = vmatprep.subr.mxu0 0.0
    %1811 = vmatpush1.msra.mxu0 %v250
    %1812 = vmatprep.subr.mxu0 0.0
    %1813 = vmatpush1.msra.mxu0 %v251
    %1814 = vmatprep.subr.mxu0 0.0
    %1815 = vmatpush1.msra.mxu0 %v252
    %1816 = vmatprep.subr.mxu0 0.0
    %1817 = vmatpush1.msra.mxu0 %v253
    %1818 = vmatprep.subr.mxu0 0.0
    %1819 = vmatpush1.msra.mxu0 %v254
    %1820 = vmatprep.subr.mxu0 0.0
    %1821 = vmatpush1.msra.mxu0 %v255
    %1822 = vmatprep.subr.mxu0 0.0
    %1823 = vmatpush1.msra.mxu0 %v256
    %1824 = vmatprep.subr.mxu0 0.0
    %1825 = vmatpush1.msra.mxu0 %v257
    %1826 = vmatprep.subr.mxu0 0.0
    %1827 = vmatpush1.msra.mxu0 %v258
    %1828 = vmatprep.subr.mxu0 0.0
    %1829 = vmatpush1.msra.mxu0 0.0
    %1830 = vmatprep.subr.mxu0 0.0
    %1831 = vmatpush1.msra.mxu0 0.0
    %1832 = vmatprep.subr.mxu0 0.0
    %1833 = vmatpush1.msra.mxu0 0.0
    %1834 = vmatprep.subr.mxu0 0.0
    %1835 = vmatpush1.msra.mxu0 0.0
    %1836 = vmatprep.subr.mxu0 0.0
    %1837 = vmatpush1.msra.mxu0 0.0
    %1838 = vmatprep.subr.mxu0 0.0
    %1839 = vmatpush1.msra.mxu0 0.0
    %1840 = vmatprep.subr.mxu0 0.0
    %1841 = vmatpush1.msra.mxu0 0.0
    %1842 = vmatprep.subr.mxu0 0.0
    %1843 = vmatpush1.msra.mxu0 0.0
    %1844 = vmatprep.subr.mxu0 0.0
    %1845 = vmatpush1.msra.mxu0 0.0
    %1846 = vmatprep.subr.mxu0 0.0
    %1847 = vmatpush1.msra.mxu0 0.0
    %1848 = vmatprep.subr.mxu0 0.0
    %1849 = vmatpush1.msra.mxu0 0.0
    %1850 = vmatprep.subr.mxu0 0.0
    %1851 = vmatpush1.msra.mxu0 0.0
    %1852 = vmatprep.subr.mxu0 0.0
    %1853 = vmatpush1.msra.mxu0 0.0
    %1854 = vmatprep.subr.mxu0 0.0
    %1855 = vmatpush1.msra.mxu0 0.0
    %1856 = vmatprep.subr.mxu0 0.0
    %1857 = vmatpush1.msra.mxu0 0.0
    %1858 = vmatprep.subr.mxu0 0.0
    %1859 = vmatpush1.msra.mxu0 0.0
    %1860 = vmatprep.mubr.f32.mxu0 0.0
    %1861 = vmatmul.mubr.f32.gmra.mrb[0].mxu0 %v1793
    %v1862 = vpop.f32.mrb[0].mxu0
    %v1863 = vadd.f32 %v237, %v1862
    %v1864 = vpop.f32.mrb[0].mxu0
    %1865 = vdwg.mxu0
    %1866 = vmatprep.subr.mxu0 0.0
    %1867 = vmatpush1.msra.mxu0 %v329
    %1868 = vmatprep.subr.mxu0 0.0
    %1869 = vmatpush1.msra.mxu0 %v330
    %1870 = vmatprep.subr.mxu0 0.0
    %1871 = vmatpush1.msra.mxu0 %v331
    %1872 = vmatprep.subr.mxu0 0.0
    %1873 = vmatpush1.msra.mxu0 %v332
    %1874 = vmatprep.subr.mxu0 0.0
    %1875 = vmatpush1.msra.mxu0 %v333
    %1876 = vmatprep.subr.mxu0 0.0
    %1877 = vmatpush1.msra.mxu0 %v334
    %1878 = vmatprep.subr.mxu0 0.0
    %1879 = vmatpush1.msra.mxu0 %v335
    %1880 = vmatprep.subr.mxu0 0.0
    %1881 = vmatpush1.msra.mxu0 %v336
    %1882 = vmatprep.subr.mxu0 0.0
    %1883 = vmatpush1.msra.mxu0 %v337
    %1884 = vmatprep.subr.mxu0 0.0
    %1885 = vmatpush1.msra.mxu0 %v338
    %1886 = vmatprep.subr.mxu0 0.0
    %1887 = vmatpush1.msra.mxu0 %v339
    %1888 = vmatprep.subr.mxu0 0.0
    %1889 = vmatpush1.msra.mxu0 %v340
    %1890 = vmatprep.subr.mxu0 0.0
    %1891 = vmatpush1.msra.mxu0 %v341
    %1892 = vmatprep.subr.mxu0 0.0
    %1893 = vmatpush1.msra.mxu0 %v342
    %1894 = vmatprep.subr.mxu0 0.0
    %1895 = vmatpush1.msra.mxu0 %v343
    %1896 = vmatprep.subr.mxu0 0.0
    %1897 = vmatpush1.msra.mxu0 %v344
    %1898 = vmatprep.subr.mxu0 0.0
    %1899 = vmatpush1.msra.mxu0 0.0
    %1900 = vmatprep.subr.mxu0 0.0
    %1901 = vmatpush1.msra.mxu0 0.0
    %1902 = vmatprep.subr.mxu0 0.0
    %1903 = vmatpush1.msra.mxu0 0.0
    %1904 = vmatprep.subr.mxu0 0.0
    %1905 = vmatpush1.msra.mxu0 0.0
    %1906 = vmatprep.subr.mxu0 0.0
    %1907 = vmatpush1.msra.mxu0 0.0
    %1908 = vmatprep.subr.mxu0 0.0
    %1909 = vmatpush1.msra.mxu0 0.0
    %1910 = vmatprep.subr.mxu0 0.0
    %1911 = vmatpush1.msra.mxu0 0.0
    %1912 = vmatprep.subr.mxu0 0.0
    %1913 = vmatpush1.msra.mxu0 0.0
    %1914 = vmatprep.subr.mxu0 0.0
    %1915 = vmatpush1.msra.mxu0 0.0
    %1916 = vmatprep.subr.mxu0 0.0
    %1917 = vmatpush1.msra.mxu0 0.0
    %1918 = vmatprep.subr.mxu0 0.0
    %1919 = vmatpush1.msra.mxu0 0.0
    %1920 = vmatprep.subr.mxu0 0.0
    %1921 = vmatpush1.msra.mxu0 0.0
    %1922 = vmatprep.subr.mxu0 0.0
    %1923 = vmatpush1.msra.mxu0 0.0
    %1924 = vmatprep.subr.mxu0 0.0
    %1925 = vmatpush1.msra.mxu0 0.0
    %1926 = vmatprep.subr.mxu0 0.0
    %1927 = vmatpush1.msra.mxu0 0.0
    %1928 = vmatprep.subr.mxu0 0.0
    %1929 = vmatpush1.msra.mxu0 0.0
    %1930 = vmatprep.mubr.f32.mxu0 0.0
    %1931 = vmatmul.mubr.f32.gmra.mrb[0].mxu0 %v1722
    %v1932 = vpop.f32.mrb[0].mxu0
    %v1933 = vadd.f32 0.0, %v1932
    %v1934 = vpop.f32.mrb[0].mxu0
    %1935 = vdwg.mxu0
    %v1936 = vadd.f32 %v1795, %v1933
    %v1937 = vtanh.pop %v1936
    %1938 = vmatprep.subr.mxu0 0.0
    %1939 = vmatpush1.msra.mxu0 %v417
    %1940 = vmatprep.subr.mxu0 0.0
    %1941 = vmatpush1.msra.mxu0 %v418
    %1942 = vmatprep.subr.mxu0 0.0
    %1943 = vmatpush1.msra.mxu0 %v419
    %1944 = vmatprep.subr.mxu0 0.0
    %1945 = vmatpush1.msra.mxu0 %v420
    %1946 = vmatprep.subr.mxu0 0.0
    %1947 = vmatpush1.msra.mxu0 %v421
    %1948 = vmatprep.subr.mxu0 0.0
    %1949 = vmatpush1.msra.mxu0 %v422
    %1950 = vmatprep.subr.mxu0 0.0
    %1951 = vmatpush1.msra.mxu0 %v423
    %1952 = vmatprep.subr.mxu0 0.0
    %1953 = vmatpush1.msra.mxu0 %v424
    %1954 = vmatprep.subr.mxu0 0.0
    %1955 = vmatpush1.msra.mxu0 %v425
    %1956 = vmatprep.subr.mxu0 0.0
    %1957 = vmatpush1.msra.mxu0 %v426
    %1958 = vmatprep.subr.mxu0 0.0
    %1959 = vmatpush1.msra.mxu0 %v427
    %1960 = vmatprep.subr.mxu0 0.0
    %1961 = vmatpush1.msra.mxu0 %v428
    %1962 = vmatprep.subr.mxu0 0.0
    %1963 = vmatpush1.msra.mxu0 %v429
    %1964 = vmatprep.subr.mxu0 0.0
    %1965 = vmatpush1.msra.mxu0 %v430
    %1966 = vmatprep.subr.mxu0 0.0
    %1967 = vmatpush1.msra.mxu0 %v431
    %1968 = vmatprep.subr.mxu0 0.0
    %1969 = vmatpush1.msra.mxu0 %v432
    %1970 = vmatprep.subr.mxu0 0.0
    %1971 = vmatpush1.msra.mxu0 0.0
    %1972 = vmatprep.subr.mxu0 0.0
    %1973 = vmatpush1.msra.mxu0 0.0
    %1974 = vmatprep.subr.mxu0 0.0
    %1975 = vmatpush1.msra.mxu0 0.0
    %1976 = vmatprep.subr.mxu0 0.0
    %1977 = vmatpush1.msra.mxu0 0.0
    %1978 = vmatprep.subr.mxu0 0.0
    %1979 = vmatpush1.msra.mxu0 0.0
    %1980 = vmatprep.subr.mxu0 0.0
    %1981 = vmatpush1.msra.mxu0 0.0
    %1982 = vmatprep.subr.mxu0 0.0
    %1983 = vmatpush1.msra.mxu0 0.0
    %1984 = vmatprep.subr.mxu0 0.0
    %1985 = vmatpush1.msra.mxu0 0.0
    %1986 = vmatprep.subr.mxu0 0.0
    %1987 = vmatpush1.msra.mxu0 0.0
    %1988 = vmatprep.subr.mxu0 0.0
    %1989 = vmatpush1.msra.mxu0 0.0
    %1990 = vmatprep.subr.mxu0 0.0
    %1991 = vmatpush1.msra.mxu0 0.0
    %1992 = vmatprep.subr.mxu0 0.0
    %1993 = vmatpush1.msra.mxu0 0.0
    %1994 = vmatprep.subr.mxu0 0.0
    %1995 = vmatpush1.msra.mxu0 0.0
    %1996 = vmatprep.subr.mxu0 0.0
    %1997 = vmatpush1.msra.mxu0 0.0
    %1998 = vmatprep.subr.mxu0 0.0
    %1999 = vmatpush1.msra.mxu0 0.0
    %2000 = vmatprep.subr.mxu0 0.0
    %2001 = vmatpush1.msra.mxu0 0.0
    %2002 = vmatprep.mubr.f32.mxu0 0.0
    %2003 = vmatmul.mubr.f32.gmra.mrb[0].mxu0 %v1937
    %v2004 = vpop.f32.mrb[0].mxu0
    %v2005 = vadd.f32 %v1863, %v2004
    %v2006 = vpop.f32.mrb[0].mxu0
    %2007 = vdwg.mxu0
    %v2008 = vtanh.pop %v2005
    %2009 = vst [vmem:[%s11] sm:$0xff] %v1937
    %s2010 = scalar_lea.vmem %s11, 8
    %2011 = vst [vmem:[%s2010] sm:$0xff] %v2008
    %v2012 = vld [vmem:[#allocation7] sm:$0xff]
    %v2013 = vld [vmem:[#allocation7 + $0x8] sm:$0xff]
    %v2014 = vld [vmem:[#allocation7 + $0x10] sm:$0xff]
    %v2015 = vld [vmem:[#allocation7 + $0x18] sm:$0xff]
    %v2016 = vld [vmem:[#allocation7 + $0x20] sm:$0xff]
    %v2017 = vld [vmem:[#allocation7 + $0x28] sm:$0xff]
    %v2018 = vld [vmem:[#allocation7 + $0x30] sm:$0xff]
    %v2019 = vld [vmem:[#allocation7 + $0x38] sm:$0xff]
    %v2020 = vld [vmem:[#allocation7 + $0x40] sm:$0xff]
    %v2021 = vld [vmem:[#allocation7 + $0x48] sm:$0xff]
    %v2022 = vld [vmem:[#allocation7 + $0x50] sm:$0xff]
    %v2023 = vld [vmem:[#allocation7 + $0x58] sm:$0xff]
    %v2024 = vld [vmem:[#allocation7 + $0x60] sm:$0xff]
    %v2025 = vld [vmem:[#allocation7 + $0x68] sm:$0xff]
    %v2026 = vld [vmem:[#allocation7 + $0x70] sm:$0xff]
    %v2027 = vld [vmem:[#allocation7 + $0x78] sm:$0xff]
    %v2028 = vld [vmem:[%s9] sm:$0x1]
    %v2030 = vlaneseq
    %v2031 = vshrl.u32 %v2030, 7
    %v2032 = vsub.s32 0, %v2031
    %v2033 = vrot.slane %v2028, %v2032
    %2035 = vmatprep.subr.mxu0 0.0
    %2036 = vmatpush1.msra.mxu0 %v2012
    %2037 = vmatprep.subr.mxu0 0.0
    %2038 = vmatpush1.msra.mxu0 %v2013
    %2039 = vmatprep.subr.mxu0 0.0
    %2040 = vmatpush1.msra.mxu0 %v2014
    %2041 = vmatprep.subr.mxu0 0.0
    %2042 = vmatpush1.msra.mxu0 %v2015
    %2043 = vmatprep.subr.mxu0 0.0
    %2044 = vmatpush1.msra.mxu0 %v2016
    %2045 = vmatprep.subr.mxu0 0.0
    %2046 = vmatpush1.msra.mxu0 %v2017
    %2047 = vmatprep.subr.mxu0 0.0
    %2048 = vmatpush1.msra.mxu0 %v2018
    %2049 = vmatprep.subr.mxu0 0.0
    %2050 = vmatpush1.msra.mxu0 %v2019
    %2051 = vmatprep.subr.mxu0 0.0
    %2052 = vmatpush1.msra.mxu0 %v2020
    %2053 = vmatprep.subr.mxu0 0.0
    %2054 = vmatpush1.msra.mxu0 %v2021
    %2055 = vmatprep.subr.mxu0 0.0
    %2056 = vmatpush1.msra.mxu0 %v2022
    %2057 = vmatprep.subr.mxu0 0.0
    %2058 = vmatpush1.msra.mxu0 %v2023
    %2059 = vmatprep.subr.mxu0 0.0
    %2060 = vmatpush1.msra.mxu0 %v2024
    %2061 = vmatprep.subr.mxu0 0.0
    %2062 = vmatpush1.msra.mxu0 %v2025
    %2063 = vmatprep.subr.mxu0 0.0
    %2064 = vmatpush1.msra.mxu0 %v2026
    %2065 = vmatprep.subr.mxu0 0.0
    %2066 = vmatpush1.msra.mxu0 %v2027
    %2067 = vmatprep.subr.mxu0 0.0
    %2068 = vmatpush1.msra.mxu0 0.0
    %2069 = vmatprep.subr.mxu0 0.0
    %2070 = vmatpush1.msra.mxu0 0.0
    %2071 = vmatprep.subr.mxu0 0.0
    %2072 = vmatpush1.msra.mxu0 0.0
    %2073 = vmatprep.subr.mxu0 0.0
    %2074 = vmatpush1.msra.mxu0 0.0
    %2075 = vmatprep.subr.mxu0 0.0
    %2076 = vmatpush1.msra.mxu0 0.0
    %2077 = vmatprep.subr.mxu0 0.0
    %2078 = vmatpush1.msra.mxu0 0.0
    %2079 = vmatprep.subr.mxu0 0.0
    %2080 = vmatpush1.msra.mxu0 0.0
    %2081 = vmatprep.subr.mxu0 0.0
    %2082 = vmatpush1.msra.mxu0 0.0
    %2083 = vmatprep.subr.mxu0 0.0
    %2084 = vmatpush1.msra.mxu0 0.0
    %2085 = vmatprep.subr.mxu0 0.0
    %2086 = vmatpush1.msra.mxu0 0.0
    %2087 = vmatprep.subr.mxu0 0.0
    %2088 = vmatpush1.msra.mxu0 0.0
    %2089 = vmatprep.subr.mxu0 0.0
    %2090 = vmatpush1.msra.mxu0 0.0
    %2091 = vmatprep.subr.mxu0 0.0
    %2092 = vmatpush1.msra.mxu0 0.0
    %2093 = vmatprep.subr.mxu0 0.0
    %2094 = vmatpush1.msra.mxu0 0.0
    %2095 = vmatprep.subr.mxu0 0.0
    %2096 = vmatpush1.msra.mxu0 0.0
    %2097 = vmatprep.subr.mxu0 0.0
    %2098 = vmatpush1.msra.mxu0 0.0
    %2099 = vmatprep.mubr.f32.mxu0 0.0
    %2100 = vmatmul.mubr.f32.gmra.mrb[0].mxu0 %v2008
    %v2101 = vpop.f32.mrb[0].mxu0
    %v2102 = vadd.f32 %v2033, %v2101
    %v2103 = vpop.f32.mrb[0].mxu0
    %2104 = vdwg.mxu0
    %v2105 = vxor.u32 %v2102, 2147483648
    %v2106 = vmul.f32 %v2105, 1.442695
    %v2107 = vpow.pop %v2106
    %v2108 = vadd.f32 %v2107, 1.0
    %v2109 = vrcp.pop %v2108
    %v2110 = vmul.f32 1.0, %v2109
    %2111 = vst [vmem:[%s10] sm:$0xff] %v2110
    // Predicated region
    $region54: #{rnn_classifier_forward.1} parent=1 // pred_check
      _
    $region55: #{rnn_classifier_forward.1} parent=1 // pred_check_branch
      %2113 = sbr.rel (0) target = $region57
    $region56: #{rnn_classifier_forward.1} parent=1 // pred_region
      _
    $region57: #{rnn_classifier_forward.1} parent=1 // pred_fallthru
      _
    // Predicated region
    $region58: #{rnn_classifier_forward.1} parent=1 // pred_check
      _
    $region59: #{rnn_classifier_forward.1} parent=1 // pred_check_branch
      %2115 = sbr.rel (0) target = $region61
    $region60: #{rnn_classifier_forward.1} parent=1 // pred_region
      _
    $region61: #{rnn_classifier_forward.1} parent=1 // pred_fallthru
      _
    // Predicated region
    $region62: #{rnn_classifier_forward.1} parent=1 // pred_check
      _
    $region63: #{rnn_classifier_forward.1} parent=1 // pred_check_branch
      %2117 = sbr.rel (0) target = $region65
    $region64: #{rnn_classifier_forward.1} parent=1 // pred_region
      _
    $region65: #{rnn_classifier_forward.1} parent=1 // pred_fallthru
      _
    // Predicated region
    $region66: #{rnn_classifier_forward.1} parent=1 // pred_check
      _
    $region67: #{rnn_classifier_forward.1} parent=1 // pred_check_branch
      %2119 = sbr.rel (0) target = $region69
    $region68: #{rnn_classifier_forward.1} parent=1 // pred_region
      _
    $region69: #{rnn_classifier_forward.1} parent=1 // pred_fallthru
      _
    %2120 = vsyncpa [#allocation4], 1
    %2121 = vsyncpa [#allocation6], 1

</llo_original>
